<compile_context>
chip_gen: v5e
topology: v5e:2x2
jax: 0.10.0
libtpu: 0.0.40
codegen_flags: <defaults>
</compile_context>

<pallas_src>
import functools

import jax
import jax.numpy as jnp
from jax import lax
from jax.experimental import pallas as pl
from jax.experimental.pallas import tpu as pltpu


BN_EPS = 1e-5
LEAKY_SLOPE = 0.2
_LANE = 128
_CHUNK = 512                      # inner register-chunk width (lanes) for the conv accumulator
_VMEM_LIMIT = 32 * 1024 * 1024


def _conv_stats_kernel(x_ref, halo_ref, w_ref, mask_ref, y_ref, stat_ref, xext_ref,
                       *, shifts, tile_m, chunk):
    """Phase 1: shifted-slice conv (no im2col) + masked per-tile partial BN stats.

    x_ref:    [Cin, TM]          bf16  flat padded-position input tile
    halo_ref: [1, Cin, HALO]     bf16  right-halo strip for this tile
    w_ref:    [KH*KW, Cout, Cin] bf16  per-tap conv weights (tap order matches `shifts`)
    mask_ref: [1, TM]            bf16  1.0 where the padded position is a real conv output
    y_ref:    [Cout, TM]         bf16  conv output tile (staged to HBM for phase 2)
    stat_ref: [1, Cout, 2]       f32   per-tile (sum, sum-of-squares) over valid positions
    xext_ref: [Cin, TM+HALO]     bf16  VMEM scratch: tile + halo stitched together
    """
    cout = y_ref.shape[0]

    # Stitch the main tile and its halo so every shifted tap view is a plain static slice.
    xext_ref[:, :tile_m] = x_ref[...]
    xext_ref[:, tile_m:] = halo_ref[0]

    s_tot = jnp.zeros((cout, 1), jnp.float32)
    ss_tot = jnp.zeros((cout, 1), jnp.float32)

    for c in range(tile_m // chunk):              # static unroll; accumulator stays in vregs
        base = c * chunk
        acc = jnp.zeros((cout, chunk), jnp.float32)
        for t, sh in enumerate(shifts):           # KH*KW shifted-slice matmuls on the MXU
            xs = xext_ref[:, base + sh:base + sh + chunk]             # [Cin, chunk] bf16
            acc = acc + jnp.dot(w_ref[t], xs, preferred_element_type=jnp.float32)
        y_ref[:, base:base + chunk] = acc.astype(y_ref.dtype)

        m = mask_ref[:, base:base + chunk].astype(jnp.float32)        # [1, chunk]
        am = acc * m
        s_tot = s_tot + jnp.sum(am, axis=1, keepdims=True)            # XLU cross-lane reduce
        ss_tot = ss_tot + jnp.sum(acc * am, axis=1, keepdims=True)

    stat_ref[...] = jnp.concatenate([s_tot, ss_tot], axis=1)[None]    # [1, Cout, 2]


def _bn_act_kernel(y_ref, scale_ref, shift_ref, o_ref):
    """Phase 2: folded BatchNorm affine + LeakyReLU(0.2). All arithmetic in f32."""
    y = y_ref[...].astype(jnp.float32)
    out = y * scale_ref[...] + shift_ref[...]
    o_ref[...] = jnp.where(out >= 0, out, LEAKY_SLOPE * out)


def noise_encoder_forward(x_nchw, weight_oihw, gamma, beta, *, stride, padding, tile_m=8192):
    """NoiseEncoder.forward. x_nchw: [N, Cin, H, W], weight: [Cout, Cin, KH, KW]."""
    N, Cin, H, W = x_nchw.shape
    Cout, _, KH, KW = weight_oihw.shape
    Ho = (H + 2 * padding - KH) // stride + 1
    Wo = (W + 2 * padding - KW) // stride + 1
    Hp, Wp = H + 2 * padding, W + 2 * padding

    # The conv is evaluated at every padded top-left position; positions that are not real conv
    # outputs (row/col overhang, stride skips, final zero pad) are masked out of the BN stats and
    # discarded at the end.
    # TODO(synk): for stride > 1 this computes stride^2 more positions than strictly needed.
    M_full = N * Hp * Wp
    M_valid = N * Ho * Wo

    tile_m = max(_CHUNK, (int(tile_m) // _CHUNK) * _CHUNK)
    num_tiles = -(-M_full // tile_m)
    Mp = num_tiles * tile_m

    max_shift = (KH - 1) * Wp + (KW - 1)
    halo = max(_LANE, -(-max_shift // _LANE) * _LANE)

    # ---- glue: NCHW -> [Cin, flat padded positions] bf16, plus tiny per-tile halo strips ----
    x = jnp.transpose(x_nchw, (1, 0, 2, 3)).astype(jnp.bfloat16)              # [Cin, N, H, W]
    xp = jnp.pad(x, ((0, 0), (0, 0), (padding, padding), (padding, padding))) # [Cin, N, Hp, Wp]
    xflat = jnp.pad(xp.reshape(Cin, M_full), ((0, 0), (0, Mp - M_full + halo)))  # [Cin, Mp+halo]

    starts = (jnp.arange(num_tiles) + 1) * tile_m
    halo_idx = starts[:, None] + jnp.arange(halo)[None, :]                    # [T, halo]
    x_halo = jnp.transpose(xflat[:, halo_idx], (1, 0, 2))                     # [T, Cin, halo]

    # per-tap weights [KH*KW, Cout, Cin]; tap order matches the shift list below
    w_taps = jnp.transpose(weight_oihw, (2, 3, 0, 1)).reshape(KH * KW, Cout, Cin)
    w_taps = w_taps.astype(jnp.bfloat16)
    shifts = tuple(kh * Wp + kw for kh in range(KH) for kw in range(KW))

    # validity mask over padded positions (true conv outputs only)
    hh = jnp.arange(Hp)
    ww = jnp.arange(Wp)
    vh = ((hh % stride) == 0) & ((hh // stride) < Ho)
    vw = ((ww % stride) == 0) & ((ww // stride) < Wo)
    mask2d = (vh[:, None] & vw[None, :]).astype(jnp.bfloat16)                 # [Hp, Wp]
    mask = jnp.broadcast_to(mask2d.reshape(1, Hp * Wp), (N, Hp * Wp)).reshape(1, M_full)
    mask = jnp.pad(mask, ((0, 0), (0, Mp - M_full)))                          # [1, Mp]

    # ---- phase 1: in-kernel shifted-slice conv + per-tile partial BN stats (M axis parallel) ----
    y_T, partials = pl.pallas_call(
        functools.partial(_conv_stats_kernel, shifts=shifts, tile_m=tile_m, chunk=_CHUNK),
        out_shape=(
            jax.ShapeDtypeStruct((Cout, Mp), jnp.bfloat16),
            jax.ShapeDtypeStruct((num_tiles, Cout, 2), jnp.float32),
        ),
        grid=(num_tiles,),
        in_specs=[
            pl.BlockSpec((Cin, tile_m), lambda i: (0, i)),
            pl.BlockSpec((1, Cin, halo), lambda i: (i, 0, 0)),
            pl.BlockSpec((KH * KW, Cout, Cin), lambda i: (0, 0, 0)),
            pl.BlockSpec((1, tile_m), lambda i: (0, i)),
        ],
        out_specs=(
            pl.BlockSpec((Cout, tile_m), lambda i: (0, i)),
            pl.BlockSpec((1, Cout, 2), lambda i: (i, 0, 0)),
        ),
        scratch_shapes=[pltpu.VMEM((Cin, tile_m + halo), jnp.bfloat16)],
        compiler_params=pltpu.CompilerParams(
            dimension_semantics=("parallel",),
            vmem_limit_bytes=_VMEM_LIMIT,
        ),
    )(xflat, x_halo, w_taps, mask)

    # ---- fold BN once (tiny, 8 channels): scale = gamma*rsqrt(var+eps), shift = beta - mean*scale
    sums = jnp.sum(partials, axis=0)                      # [Cout, 2]
    mean = sums[:, 0] / M_valid
    var = sums[:, 1] / M_valid - mean * mean              # biased variance (PyTorch training BN)
    inv_std = lax.rsqrt(var + BN_EPS)
    g = gamma.astype(jnp.float32).reshape(Cout)
    b = beta.astype(jnp.float32).reshape(Cout)
    scale = (g * inv_std).reshape(Cout, 1)
    shift = (b - mean * g * inv_std).reshape(Cout, 1)

    # ---- phase 2: folded BN affine + LeakyReLU, lane-dense [Cout, M] output ----
    out_T = pl.pallas_call(
        _bn_act_kernel,
        out_shape=jax.ShapeDtypeStruct((Cout, Mp), jnp.float32),
        grid=(num_tiles,),
        in_specs=[
            pl.BlockSpec((Cout, tile_m), lambda i: (0, i)),
            pl.BlockSpec((Cout, 1), lambda i: (0, 0)),
            pl.BlockSpec((Cout, 1), lambda i: (0, 0)),
        ],
        out_specs=pl.BlockSpec((Cout, tile_m), lambda i: (0, i)),
        compiler_params=pltpu.CompilerParams(
            dimension_semantics=("parallel",),
            vmem_limit_bytes=_VMEM_LIMIT,
        ),
    )(y_T, scale, shift)

    # ---- glue: drop padded/invalid positions, back to NCHW ----
    # TODO(synk): a fused downstream consumer could take the lane-dense [Cout, M] slab directly
    # and skip this pure-layout pass (~64*M bytes of HBM traffic).
    out = out_T[:, :M_full].reshape(Cout, N, Hp, Wp)
    out = out[:, :, 0:(Ho - 1) * stride + 1:stride, 0:(Wo - 1) * stride + 1:stride]
    return jnp.transpose(out, (1, 0, 2, 3))               # [N, Cout, Ho, Wo]


def _reference_forward(x_nchw, weight_oihw, gamma, beta, *, stride, padding):
    """Pure-JAX f32 reference (conv + training-mode BN + LeakyReLU)."""
    y = lax.conv_general_dilated(
        x_nchw.astype(jnp.float32), weight_oihw.astype(jnp.float32),
        window_strides=(stride, stride),
        padding=[(padding, padding), (padding, padding)],
        dimension_numbers=("NCHW", "OIHW", "NCHW"),
    )
    mean = jnp.mean(y, axis=(0, 2, 3), keepdims=True)
    var = jnp.mean((y - mean) ** 2, axis=(0, 2, 3), keepdims=True)
    xhat = (y - mean) * lax.rsqrt(var + BN_EPS)
    out = gamma.reshape(1, -1, 1, 1) * xhat + beta.reshape(1, -1, 1, 1)
    return jnp.where(out >= 0, out, LEAKY_SLOPE * out)


if __name__ == "__main__":
    # Module hyper-params (small, consistent with NoiseEncoder.__init__).
    channel_in, channel_out = 4, 8
    kernel_size, stride, padding = 3, 1, 1
    N, H, W = 2, 16, 16

    key = jax.random.PRNGKey(0)
    kx, kw = jax.random.split(key)

    x = jax.random.normal(kx, (N, channel_in, H, W), dtype=jnp.float32)
    conv_w = 0.1 * jax.random.normal(
        kw, (channel_out, channel_in, kernel_size, kernel_size), dtype=jnp.float32)
    # Fresh BatchNorm2d: weight=1, bias=0.
    bn_gamma = jnp.ones((channel_out,), dtype=jnp.float32)
    bn_beta = jnp.zeros((channel_out,), dtype=jnp.float32)

    # tile_m=512 exercises the multi-tile + halo-crossing path (M_full = 2*18*18 = 648 -> 2 tiles).
    fwd = jax.jit(functools.partial(
        noise_encoder_forward, stride=stride, padding=padding, tile_m=512))
    out = fwd(x, conv_w, bn_gamma, bn_beta)
    out = jax.block_until_ready(out)

    ref = _reference_forward(x, conv_w, bn_gamma, bn_beta, stride=stride, padding=padding)
    assert out.shape == (N, channel_out, H, W), out.shape
    # bf16 MXU operands / bf16 y staging (f32 accumulation) -> slightly looser tolerance.
    assert jnp.allclose(out, ref, atol=5e-2, rtol=5e-2), float(jnp.max(jnp.abs(out - ref)))

    print("KERNEL_OK")
</pallas_src>

<mosaic_0001>
module attributes {stable_mosaic.version = 11 : i64} {
  func.func @_conv_stats_kernel(%arg0: i32, %arg1: memref<4x512xbf16, #tpu.memory_space<vmem>>, %arg2: memref<1x4x128xbf16, #tpu.memory_space<vmem>>, %arg3: memref<9x8x4xbf16, #tpu.memory_space<vmem>>, %arg4: memref<1x512xbf16, #tpu.memory_space<vmem>>, %arg5: memref<8x512xbf16, #tpu.memory_space<vmem>>, %arg6: memref<1x8x2xf32, #tpu.memory_space<vmem>>, %arg7: memref<4x640xbf16, #tpu.memory_space<vmem>>) attributes {dimension_semantics = [#tpu.dimension_semantics<parallel>], iteration_bounds = array<i64: 2>, scalar_prefetch = 0 : i64, scratch_operands = 1 : i64, tpu.core_type = #tpu.core_type<tc>, window_params = [{transform_indices = @transform_0, window_bounds = array<i64: 4, 512>}, {transform_indices = @transform_1, window_bounds = array<i64: 1, 4, 128>}, {pipeline_mode = #tpu.pipeline_mode<synchronous>, transform_indices = @transform_2, window_bounds = array<i64: 9, 8, 4>}, {transform_indices = @transform_3, window_bounds = array<i64: 1, 512>}, {transform_indices = @transform_4, window_bounds = array<i64: 8, 512>}, {transform_indices = @transform_5, window_bounds = array<i64: 1, 8, 2>}]} {
    %c0 = arith.constant 0 : index
    %c0_0 = arith.constant 0 : index
    %0 = vector.load %arg1[%c0, %c0_0] : memref<4x512xbf16, #tpu.memory_space<vmem>>, vector<4x512xbf16>
    %c0_1 = arith.constant 0 : index
    %c0_2 = arith.constant 0 : index
    %1 = vector.load %arg7[%c0_1, %c0_2] : memref<4x640xbf16, #tpu.memory_space<vmem>>, vector<4x512xbf16>
    tpu.vector_store %arg7[%c0_1, %c0_2], %0 {strides = array<i32>} : memref<4x640xbf16, #tpu.memory_space<vmem>>, vector<4x512xbf16>,
    %c0_3 = arith.constant 0 : index
    %c0_4 = arith.constant 0 : index
    %c0_5 = arith.constant 0 : index
    %2 = vector.load %arg2[%c0_3, %c0_4, %c0_5] : memref<1x4x128xbf16, #tpu.memory_space<vmem>>, vector<1x4x128xbf16>
    %3 = vector.shape_cast %2 : vector<1x4x128xbf16> to vector<4x128xbf16>
    %c0_6 = arith.constant 0 : index
    %c512 = arith.constant 512 : index
    %4 = vector.load %arg7[%c0_6, %c512] : memref<4x640xbf16, #tpu.memory_space<vmem>>, vector<4x128xbf16>
    tpu.vector_store %arg7[%c0_6, %c512], %3 {strides = array<i32>} : memref<4x640xbf16, #tpu.memory_space<vmem>>, vector<4x128xbf16>,
    %cst = arith.constant 0.000000e+00 : f32
    %5 = vector.broadcast %cst : f32 to vector<8x1xf32>
    %cst_7 = arith.constant 0.000000e+00 : f32
    %6 = vector.broadcast %cst_7 : f32 to vector<8x1xf32>
    %cst_8 = arith.constant 0.000000e+00 : f32
    %7 = vector.broadcast %cst_8 : f32 to vector<8x512xf32>
    %c0_9 = arith.constant 0 : index
    %c0_10 = arith.constant 0 : index
    %8 = vector.load %arg7[%c0_9, %c0_10] : memref<4x640xbf16, #tpu.memory_space<vmem>>, vector<4x512xbf16>
    %c0_11 = arith.constant 0 : index
    %c0_12 = arith.constant 0 : index
    %c0_13 = arith.constant 0 : index
    %9 = vector.load %arg3[%c0_11, %c0_12, %c0_13] : memref<9x8x4xbf16, #tpu.memory_space<vmem>>, vector<1x8x4xbf16>
    %10 = vector.shape_cast %9 : vector<1x8x4xbf16> to vector<8x4xbf16>
    %cst_14 = arith.constant dense<0.000000e+00> : vector<8x512xf32>
    %11 = tpu.matmul %10, %8, %cst_14 {dimension_numbers = #tpu.dot_dimension_numbers<[1], [0], [0], [1], [0, 0, 1, 1], [], []>} : vector<8x4xbf16>, vector<4x512xbf16>, vector<8x512xf32> -> vector<8x512xf32>
    %12 = arith.addf %7, %11 : vector<8x512xf32>
    %c0_15 = arith.constant 0 : index
    %c1 = arith.constant 1 : index
    %13 = vector.load %arg7[%c0_15, %c1] : memref<4x640xbf16, #tpu.memory_space<vmem>>, vector<4x512xbf16>
    %c1_16 = arith.constant 1 : index
    %c0_17 = arith.constant 0 : index
    %c0_18 = arith.constant 0 : index
    %14 = vector.load %arg3[%c1_16, %c0_17, %c0_18] : memref<9x8x4xbf16, #tpu.memory_space<vmem>>, vector<1x8x4xbf16>
    %15 = vector.shape_cast %14 : vector<1x8x4xbf16> to vector<8x4xbf16>
    %cst_19 = arith.constant dense<0.000000e+00> : vector<8x512xf32>
    %16 = tpu.matmul %15, %13, %cst_19 {dimension_numbers = #tpu.dot_dimension_numbers<[1], [0], [0], [1], [0, 0, 1, 1], [], []>} : vector<8x4xbf16>, vector<4x512xbf16>, vector<8x512xf32> -> vector<8x512xf32>
    %17 = arith.addf %12, %16 : vector<8x512xf32>
    %c0_20 = arith.constant 0 : index
    %c2 = arith.constant 2 : index
    %18 = vector.load %arg7[%c0_20, %c2] : memref<4x640xbf16, #tpu.memory_space<vmem>>, vector<4x512xbf16>
    %c2_21 = arith.constant 2 : index
    %c0_22 = arith.constant 0 : index
    %c0_23 = arith.constant 0 : index
    %19 = vector.load %arg3[%c2_21, %c0_22, %c0_23] : memref<9x8x4xbf16, #tpu.memory_space<vmem>>, vector<1x8x4xbf16>
    %20 = vector.shape_cast %19 : vector<1x8x4xbf16> to vector<8x4xbf16>
    %cst_24 = arith.constant dense<0.000000e+00> : vector<8x512xf32>
    %21 = tpu.matmul %20, %18, %cst_24 {dimension_numbers = #tpu.dot_dimension_numbers<[1], [0], [0], [1], [0, 0, 1, 1], [], []>} : vector<8x4xbf16>, vector<4x512xbf16>, vector<8x512xf32> -> vector<8x512xf32>
    %22 = arith.addf %17, %21 : vector<8x512xf32>
    %c0_25 = arith.constant 0 : index
    %c18 = arith.constant 18 : index
    %23 = vector.load %arg7[%c0_25, %c18] : memref<4x640xbf16, #tpu.memory_space<vmem>>, vector<4x512xbf16>
    %c3 = arith.constant 3 : index
    %c0_26 = arith.constant 0 : index
    %c0_27 = arith.constant 0 : index
    %24 = vector.load %arg3[%c3, %c0_26, %c0_27] : memref<9x8x4xbf16, #tpu.memory_space<vmem>>, vector<1x8x4xbf16>
    %25 = vector.shape_cast %24 : vector<1x8x4xbf16> to vector<8x4xbf16>
    %cst_28 = arith.constant dense<0.000000e+00> : vector<8x512xf32>
    %26 = tpu.matmul %25, %23, %cst_28 {dimension_numbers = #tpu.dot_dimension_numbers<[1], [0], [0], [1], [0, 0, 1, 1], [], []>} : vector<8x4xbf16>, vector<4x512xbf16>, vector<8x512xf32> -> vector<8x512xf32>
    %27 = arith.addf %22, %26 : vector<8x512xf32>
    %c0_29 = arith.constant 0 : index
    %c19 = arith.constant 19 : index
    %28 = vector.load %arg7[%c0_29, %c19] : memref<4x640xbf16, #tpu.memory_space<vmem>>, vector<4x512xbf16>
    %c4 = arith.constant 4 : index
    %c0_30 = arith.constant 0 : index
    %c0_31 = arith.constant 0 : index
    %29 = vector.load %arg3[%c4, %c0_30, %c0_31] : memref<9x8x4xbf16, #tpu.memory_space<vmem>>, vector<1x8x4xbf16>
    %30 = vector.shape_cast %29 : vector<1x8x4xbf16> to vector<8x4xbf16>
    %cst_32 = arith.constant dense<0.000000e+00> : vector<8x512xf32>
    %31 = tpu.matmul %30, %28, %cst_32 {dimension_numbers = #tpu.dot_dimension_numbers<[1], [0], [0], [1], [0, 0, 1, 1], [], []>} : vector<8x4xbf16>, vector<4x512xbf16>, vector<8x512xf32> -> vector<8x512xf32>
    %32 = arith.addf %27, %31 : vector<8x512xf32>
    %c0_33 = arith.constant 0 : index
    %c20 = arith.constant 20 : index
    %33 = vector.load %arg7[%c0_33, %c20] : memref<4x640xbf16, #tpu.memory_space<vmem>>, vector<4x512xbf16>
    %c5 = arith.constant 5 : index
    %c0_34 = arith.constant 0 : index
    %c0_35 = arith.constant 0 : index
    %34 = vector.load %arg3[%c5, %c0_34, %c0_35] : memref<9x8x4xbf16, #tpu.memory_space<vmem>>, vector<1x8x4xbf16>
    %35 = vector.shape_cast %34 : vector<1x8x4xbf16> to vector<8x4xbf16>
    %cst_36 = arith.constant dense<0.000000e+00> : vector<8x512xf32>
    %36 = tpu.matmul %35, %33, %cst_36 {dimension_numbers = #tpu.dot_dimension_numbers<[1], [0], [0], [1], [0, 0, 1, 1], [], []>} : vector<8x4xbf16>, vector<4x512xbf16>, vector<8x512xf32> -> vector<8x512xf32>
    %37 = arith.addf %32, %36 : vector<8x512xf32>
    %c0_37 = arith.constant 0 : index
    %c36 = arith.constant 36 : index
    %38 = vector.load %arg7[%c0_37, %c36] : memref<4x640xbf16, #tpu.memory_space<vmem>>, vector<4x512xbf16>
    %c6 = arith.constant 6 : index
    %c0_38 = arith.constant 0 : index
    %c0_39 = arith.constant 0 : index
    %39 = vector.load %arg3[%c6, %c0_38, %c0_39] : memref<9x8x4xbf16, #tpu.memory_space<vmem>>, vector<1x8x4xbf16>
    %40 = vector.shape_cast %39 : vector<1x8x4xbf16> to vector<8x4xbf16>
    %cst_40 = arith.constant dense<0.000000e+00> : vector<8x512xf32>
    %41 = tpu.matmul %40, %38, %cst_40 {dimension_numbers = #tpu.dot_dimension_numbers<[1], [0], [0], [1], [0, 0, 1, 1], [], []>} : vector<8x4xbf16>, vector<4x512xbf16>, vector<8x512xf32> -> vector<8x512xf32>
    %42 = arith.addf %37, %41 : vector<8x512xf32>
    %c0_41 = arith.constant 0 : index
    %c37 = arith.constant 37 : index
    %43 = vector.load %arg7[%c0_41, %c37] : memref<4x640xbf16, #tpu.memory_space<vmem>>, vector<4x512xbf16>
    %c7 = arith.constant 7 : index
    %c0_42 = arith.constant 0 : index
    %c0_43 = arith.constant 0 : index
    %44 = vector.load %arg3[%c7, %c0_42, %c0_43] : memref<9x8x4xbf16, #tpu.memory_space<vmem>>, vector<1x8x4xbf16>
    %45 = vector.shape_cast %44 : vector<1x8x4xbf16> to vector<8x4xbf16>
    %cst_44 = arith.constant dense<0.000000e+00> : vector<8x512xf32>
    %46 = tpu.matmul %45, %43, %cst_44 {dimension_numbers = #tpu.dot_dimension_numbers<[1], [0], [0], [1], [0, 0, 1, 1], [], []>} : vector<8x4xbf16>, vector<4x512xbf16>, vector<8x512xf32> -> vector<8x512xf32>
    %47 = arith.addf %42, %46 : vector<8x512xf32>
    %c0_45 = arith.constant 0 : index
    %c38 = arith.constant 38 : index
    %48 = vector.load %arg7[%c0_45, %c38] : memref<4x640xbf16, #tpu.memory_space<vmem>>, vector<4x512xbf16>
    %c8 = arith.constant 8 : index
    %c0_46 = arith.constant 0 : index
    %c0_47 = arith.constant 0 : index
    %49 = vector.load %arg3[%c8, %c0_46, %c0_47] : memref<9x8x4xbf16, #tpu.memory_space<vmem>>, vector<1x8x4xbf16>
    %50 = vector.shape_cast %49 : vector<1x8x4xbf16> to vector<8x4xbf16>
    %cst_48 = arith.constant dense<0.000000e+00> : vector<8x512xf32>
    %51 = tpu.matmul %50, %48, %cst_48 {dimension_numbers = #tpu.dot_dimension_numbers<[1], [0], [0], [1], [0, 0, 1, 1], [], []>} : vector<8x4xbf16>, vector<4x512xbf16>, vector<8x512xf32> -> vector<8x512xf32>
    %52 = arith.addf %47, %51 : vector<8x512xf32>
    %53 = arith.truncf %52 : vector<8x512xf32> to vector<8x512xbf16>
    %c0_49 = arith.constant 0 : index
    %c0_50 = arith.constant 0 : index
    %54 = vector.load %arg5[%c0_49, %c0_50] : memref<8x512xbf16, #tpu.memory_space<vmem>>, vector<8x512xbf16>
    tpu.vector_store %arg5[%c0_49, %c0_50], %53 {strides = array<i32>} : memref<8x512xbf16, #tpu.memory_space<vmem>>, vector<8x512xbf16>,
    %c0_51 = arith.constant 0 : index
    %c0_52 = arith.constant 0 : index
    %55 = vector.load %arg4[%c0_51, %c0_52] : memref<1x512xbf16, #tpu.memory_space<vmem>>, vector<1x512xbf16>
    %56 = arith.extf %55 : vector<1x512xbf16> to vector<1x512xf32>
    %57 = vector.broadcast %56 : vector<1x512xf32> to vector<8x512xf32>
    %58 = arith.mulf %52, %57 : vector<8x512xf32>
    %cst_53 = arith.constant dense<0.000000e+00> : vector<8xf32>
    %59 = vector.multi_reduction <add>, %58, %cst_53 [1] : vector<8x512xf32> to vector<8xf32>
    %60 = vector.shape_cast %59 : vector<8xf32> to vector<8x1xf32>
    %61 = arith.addf %5, %60 : vector<8x1xf32>
    %62 = arith.mulf %52, %58 : vector<8x512xf32>
    %cst_54 = arith.constant dense<0.000000e+00> : vector<8xf32>
    %63 = vector.multi_reduction <add>, %62, %cst_54 [1] : vector<8x512xf32> to vector<8xf32>
    %64 = vector.shape_cast %63 : vector<8xf32> to vector<8x1xf32>
    %65 = arith.addf %6, %64 : vector<8x1xf32>
    %66 = tpu.concatenate %61, %65 in 1 : vector<8x1xf32>, vector<8x1xf32> -> vector<8x2xf32>
    %67 = vector.shape_cast %66 : vector<8x2xf32> to vector<1x8x2xf32>
    %c0_55 = arith.constant 0 : index
    %c0_56 = arith.constant 0 : index
    %c0_57 = arith.constant 0 : index
    %68 = vector.load %arg6[%c0_55, %c0_56, %c0_57] : memref<1x8x2xf32, #tpu.memory_space<vmem>>, vector<1x8x2xf32>
    tpu.vector_store %arg6[%c0_55, %c0_56, %c0_57], %67 {strides = array<i32>} : memref<1x8x2xf32, #tpu.memory_space<vmem>>, vector<1x8x2xf32>,
    return
  }
  func.func @transform_0(%arg0: i32) -> (i32, i32) {
    %c0_i32 = arith.constant 0 : i32
    %c0_i32_0 = arith.constant 0 : i32
    return %c0_i32, %arg0 : i32, i32
  }
  func.func @transform_1(%arg0: i32) -> (i32, i32, i32) {
    %c0_i32 = arith.constant 0 : i32
    %c0_i32_0 = arith.constant 0 : i32
    %c0_i32_1 = arith.constant 0 : i32
    return %arg0, %c0_i32, %c0_i32_0 : i32, i32, i32
  }
  func.func @transform_2(%arg0: i32) -> (i32, i32, i32) {
    %c0_i32 = arith.constant 0 : i32
    %c0_i32_0 = arith.constant 0 : i32
    %c0_i32_1 = arith.constant 0 : i32
    %c0_i32_2 = arith.constant 0 : i32
    return %c0_i32, %c0_i32_0, %c0_i32_1 : i32, i32, i32
  }
  func.func @transform_3(%arg0: i32) -> (i32, i32) {
    %c0_i32 = arith.constant 0 : i32
    %c0_i32_0 = arith.constant 0 : i32
    return %c0_i32, %arg0 : i32, i32
  }
  func.func @transform_4(%arg0: i32) -> (i32, i32) {
    %c0_i32 = arith.constant 0 : i32
    %c0_i32_0 = arith.constant 0 : i32
    return %c0_i32, %arg0 : i32, i32
  }
  func.func @transform_5(%arg0: i32) -> (i32, i32, i32) {
    %c0_i32 = arith.constant 0 : i32
    %c0_i32_0 = arith.constant 0 : i32
    %c0_i32_1 = arith.constant 0 : i32
    return %arg0, %c0_i32, %c0_i32_0 : i32, i32, i32
  }
}

module attributes {stable_mosaic.version = 11 : i64} {
  func.func @_bn_act_kernel(%arg0: i32, %arg1: memref<8x512xbf16, #tpu.memory_space<vmem>>, %arg2: memref<8x1xf32, #tpu.memory_space<vmem>>, %arg3: memref<8x1xf32, #tpu.memory_space<vmem>>, %arg4: memref<8x512xf32, #tpu.memory_space<vmem>>) attributes {dimension_semantics = [#tpu.dimension_semantics<parallel>], iteration_bounds = array<i64: 2>, scalar_prefetch = 0 : i64, scratch_operands = 0 : i64, tpu.core_type = #tpu.core_type<tc>, window_params = [{transform_indices = @transform_0, window_bounds = array<i64: 8, 512>}, {pipeline_mode = #tpu.pipeline_mode<synchronous>, transform_indices = @transform_1, window_bounds = array<i64: 8, 1>}, {pipeline_mode = #tpu.pipeline_mode<synchronous>, transform_indices = @transform_2, window_bounds = array<i64: 8, 1>}, {transform_indices = @transform_3, window_bounds = array<i64: 8, 512>}]} {
    %c0 = arith.constant 0 : index
    %c0_0 = arith.constant 0 : index
    %0 = vector.load %arg1[%c0, %c0_0] : memref<8x512xbf16, #tpu.memory_space<vmem>>, vector<8x512xbf16>
    %1 = arith.extf %0 : vector<8x512xbf16> to vector<8x512xf32>
    %c0_1 = arith.constant 0 : index
    %c0_2 = arith.constant 0 : index
    %2 = vector.load %arg2[%c0_1, %c0_2] : memref<8x1xf32, #tpu.memory_space<vmem>>, vector<8x1xf32>
    %3 = vector.broadcast %2 : vector<8x1xf32> to vector<8x512xf32>
    %4 = arith.mulf %1, %3 : vector<8x512xf32>
    %c0_3 = arith.constant 0 : index
    %c0_4 = arith.constant 0 : index
    %5 = vector.load %arg3[%c0_3, %c0_4] : memref<8x1xf32, #tpu.memory_space<vmem>>, vector<8x1xf32>
    %6 = vector.broadcast %5 : vector<8x1xf32> to vector<8x512xf32>
    %7 = arith.addf %4, %6 : vector<8x512xf32>
    %cst = arith.constant 0.000000e+00 : f32
    %8 = vector.broadcast %cst : f32 to vector<8x512xf32>
    %9 = arith.cmpf oge, %7, %8 : vector<8x512xf32>
    %cst_5 = arith.constant 2.000000e-01 : f32
    %10 = vector.broadcast %cst_5 : f32 to vector<8x512xf32>
    %11 = arith.mulf %10, %7 : vector<8x512xf32>
    %12 = arith.select %9, %7, %11 : vector<8x512xi1>, vector<8x512xf32>
    %c0_6 = arith.constant 0 : index
    %c0_7 = arith.constant 0 : index
    %13 = vector.load %arg4[%c0_6, %c0_7] : memref<8x512xf32, #tpu.memory_space<vmem>>, vector<8x512xf32>
    tpu.vector_store %arg4[%c0_6, %c0_7], %12 {strides = array<i32>} : memref<8x512xf32, #tpu.memory_space<vmem>>, vector<8x512xf32>,
    return
  }
  func.func @transform_0(%arg0: i32) -> (i32, i32) {
    %c0_i32 = arith.constant 0 : i32
    %c0_i32_0 = arith.constant 0 : i32
    return %c0_i32, %arg0 : i32, i32
  }
  func.func @transform_1(%arg0: i32) -> (i32, i32) {
    %c0_i32 = arith.constant 0 : i32
    %c0_i32_0 = arith.constant 0 : i32
    %c0_i32_1 = arith.constant 0 : i32
    return %c0_i32, %c0_i32_0 : i32, i32
  }
  func.func @transform_2(%arg0: i32) -> (i32, i32) {
    %c0_i32 = arith.constant 0 : i32
    %c0_i32_0 = arith.constant 0 : i32
    %c0_i32_1 = arith.constant 0 : i32
    return %c0_i32, %c0_i32_0 : i32, i32
  }
  func.func @transform_3(%arg0: i32) -> (i32, i32) {
    %c0_i32 = arith.constant 0 : i32
    %c0_i32_0 = arith.constant 0 : i32
    return %c0_i32, %arg0 : i32, i32
  }
}

</mosaic_0001>

<llo_original>
// kernel: noise_encoder_forward.3
$region0: #{noise_encoder_forward.3}
  #allocation0 [shape = 'u32[]', space=smem, size = 0x4, offset = 0x4, fixed_abs, tag = 'smem constant byte address 0x4 - core index']
  #allocation1 [shape = 'u32[72,128]{1,0:T(1,128)}', space=vmem, size = 0x9000, scoped, tag = 'internal scratch']
  %s0 = inlined_call_operand.vmem [shape: bf16[8,1024], index: 0, kind: input, shape index: {}]
  %s1 = inlined_call_operand.vmem [shape: f32[8,1], index: 1, kind: input, shape index: {}]
  %s2 = inlined_call_operand.vmem [shape: f32[8,1], index: 2, kind: input, shape index: {}]
  %s3 = inlined_call_operand.vmem [shape: f32[8,1024], index: 3, kind: output, shape index: {}]
  %s4 = sld [smem:[#allocation0]]
  $region45: #{noise_encoder_forward.3} parent=0
    _
  %s6 = ssub.s32 1, %s4
  %s7 = scalar_select 0, %s6, %s4
  loop: start=0, step=1, limit=4
  $region2: #{noise_encoder_forward.3} parent=0 // loop_pre_header
    _
  $region3: #{noise_encoder_forward.3} parent=0 // loop_header
    %s9 = sphi 0, %s13
    %p10 = scmp.ge.s32.totalorder %s9, 4
    %s19 = sphi 0, %s21
    %s22 = sphi 0, %s19
    %s23 = sphi 0, %s22
    %s39 = sphi 0, %s23
    %s43 = sphi 0, %s43
    %s45 = sphi 0, %s43
    %s46 = sphi 0, %s45
    %s60 = sphi 0, %s46
    %s64 = sphi 0, %s64
    %s66 = sphi 0, %s64
    %s67 = sphi 0, %s66
    %s81 = sphi 0, %s67
    %s87 = sphi 0, %s89
    %s90 = sphi 0, %s87
    %s91 = sphi 0, %s90
    %s107 = sphi 0, %s91
  $region4: #{noise_encoder_forward.3} parent=0 // loop_header_branch
    %12 = sbr.rel (%p10) target = $region8
  $region5: #{noise_encoder_forward.3} parent=0 // loop_body
    %s14 = ssub.s32 %s9, 1
    %s15 = ssub.s32 %s9, 2
    %s16 = sadd.s32 %s9, 1
    %s17 = ssub.s32 %s9, %s16
    %p18 = scmp.eq.s32.totalorder %s17, 0
    %s20 = sadd.s32 %s19, 1
    %s21 = scalar_select %p18, %s19, %s20
    %p24 = pneg %p18
    %p25 = scmp.eq.s32.totalorder %s9, 1
    %p26 = por %p24, %p25
    %p27 = scmp.ne.s32.totalorder %s19, %s22
    %p28 = scmp.eq.s32.totalorder %s9, 0
    %p29 = por %p27, %p28
    %p30 = scmp.ne.s32.totalorder %s19, %s22
    %p31 = scmp.eq.s32.totalorder %s14, 1
    %p32 = por %p30, %p31
    %p33 = scmp.ne.s32.totalorder %s22, %s23
    %p34 = scmp.eq.s32.totalorder %s14, 0
    %p35 = por %p33, %p34
    %p36 = scmp.ne.s32.totalorder %s22, %s23
    %p37 = scmp.eq.s32.totalorder %s15, 1
    %p38 = por %p36, %p37
    %p40 = scmp.ne.s32.totalorder %s23, %s39
    %p41 = scmp.eq.s32.totalorder %s15, 0
    %p42 = por %p40, %p41
    %s44 = sadd.s32 %s43, 1
    %p47 = scmp.eq.s32.totalorder %s9, 1
    %p48 = scmp.ne.s32.totalorder %s43, %s45
    %p49 = scmp.eq.s32.totalorder %s9, 0
    %p50 = por %p48, %p49
    %p51 = scmp.ne.s32.totalorder %s43, %s45
    %p52 = scmp.eq.s32.totalorder %s14, 1
    %p53 = por %p51, %p52
    %p54 = scmp.ne.s32.totalorder %s45, %s46
    %p55 = scmp.eq.s32.totalorder %s14, 0
    %p56 = por %p54, %p55
    %p57 = scmp.ne.s32.totalorder %s45, %s46
    %p58 = scmp.eq.s32.totalorder %s15, 1
    %p59 = por %p57, %p58
    %p61 = scmp.ne.s32.totalorder %s46, %s60
    %p62 = scmp.eq.s32.totalorder %s15, 0
    %p63 = por %p61, %p62
    %s65 = sadd.s32 %s64, 1
    %p68 = scmp.eq.s32.totalorder %s9, 1
    %p69 = scmp.ne.s32.totalorder %s64, %s66
    %p70 = scmp.eq.s32.totalorder %s9, 0
    %p71 = por %p69, %p70
    %p72 = scmp.ne.s32.totalorder %s64, %s66
    %p73 = scmp.eq.s32.totalorder %s14, 1
    %p74 = por %p72, %p73
    %p75 = scmp.ne.s32.totalorder %s66, %s67
    %p76 = scmp.eq.s32.totalorder %s14, 0
    %p77 = por %p75, %p76
    %p78 = scmp.ne.s32.totalorder %s66, %s67
    %p79 = scmp.eq.s32.totalorder %s15, 1
    %p80 = por %p78, %p79
    %p82 = scmp.ne.s32.totalorder %s67, %s81
    %p83 = scmp.eq.s32.totalorder %s15, 0
    %p84 = por %p82, %p83
    %s85 = ssub.s32 %s9, %s16
    %p86 = scmp.eq.s32.totalorder %s85, 0
    %s88 = sadd.s32 %s87, 1
    %s89 = scalar_select %p86, %s87, %s88
    %p92 = pneg %p86
    %p93 = scmp.eq.s32.totalorder %s9, 1
    %p94 = por %p92, %p93
    %p95 = scmp.ne.s32.totalorder %s87, %s90
    %p96 = scmp.eq.s32.totalorder %s9, 0
    %p97 = por %p95, %p96
    %p98 = scmp.ne.s32.totalorder %s87, %s90
    %p99 = scmp.eq.s32.totalorder %s14, 1
    %p100 = por %p98, %p99
    %p101 = scmp.ne.s32.totalorder %s90, %s91
    %p102 = scmp.eq.s32.totalorder %s14, 0
    %p103 = por %p101, %p102
    %p104 = scmp.ne.s32.totalorder %s90, %s91
    %p105 = scmp.eq.s32.totalorder %s15, 1
    %p106 = por %p104, %p105
    %p108 = scmp.ne.s32.totalorder %s91, %s107
    %p109 = scmp.eq.s32.totalorder %s15, 0
    %p110 = por %p108, %p109
    %p111 = scmp.le.s32.totalorder 1, %s9
    %p112 = scmp.lt.s32.totalorder %s9, 3
    %p113 = pnand %p111, %p112
    %p114 = pneg %p113
    // Predicated region
    $region9: #{noise_encoder_forward.3} parent=5 // pred_check
      _
    $region10: #{noise_encoder_forward.3} parent=5 // pred_check_branch
      %116 = sbr.rel (%p113) target = $region12
    $region11: #{noise_encoder_forward.3} parent=5 // pred_region
      %s117 = ssub.s32 %s9, 1
      // Predicated region
      $region13: #{noise_encoder_forward.3} parent=11 // pred_check
        %p118 = pneg %p56
      $region14: #{noise_encoder_forward.3} parent=11 // pred_check_branch
        %120 = sbr.rel (%p118) target = $region16
      $region15: #{noise_encoder_forward.3} parent=11 // pred_region
        _
      $region16: #{noise_encoder_forward.3} parent=11 // pred_fallthru
        _
      // Predicated region
      $region17: #{noise_encoder_forward.3} parent=11 // pred_check
        %p121 = pneg %p77
      $region18: #{noise_encoder_forward.3} parent=11 // pred_check_branch
        %123 = sbr.rel (%p121) target = $region20
      $region19: #{noise_encoder_forward.3} parent=11 // pred_region
        _
      $region20: #{noise_encoder_forward.3} parent=11 // pred_fallthru
        _
    $region12: #{noise_encoder_forward.3} parent=5 // pred_fallthru
      _
    %p124 = scmp.lt.s32.totalorder %s9, 2
    // Predicated region
    $region21: #{noise_encoder_forward.3} parent=5 // pred_check
      %p125 = pneg %p124
    $region22: #{noise_encoder_forward.3} parent=5 // pred_check_branch
      %127 = sbr.rel (%p125) target = $region24
    $region23: #{noise_encoder_forward.3} parent=5 // pred_region
      // Predicated region
      $region25: #{noise_encoder_forward.3} parent=23 // pred_check
        %p128 = pneg %p29
      $region26: #{noise_encoder_forward.3} parent=23 // pred_check_branch
        %130 = sbr.rel (%p128) target = $region28
      $region27: #{noise_encoder_forward.3} parent=23 // pred_region
        %s131 = smul.u32 4, %s9
        %p132 = scmp.lt.s32.totalorder %s131, 7
        %s133 = scalar_select %p132, %s131, 7
        %s134 = smul.addr %s133, 4
        %s135 = scalar_lea.vmem %s0, %s134
        %s136 = smul.u32 4, %s9
      $region28: #{noise_encoder_forward.3} parent=23 // pred_fallthru
        _
    $region24: #{noise_encoder_forward.3} parent=5 // pred_fallthru
      _
    %p137 = scmp.le.s32.totalorder 1, %s9
    %p138 = scmp.lt.s32.totalorder %s9, 3
    %p139 = pnand %p137, %p138
    %p140 = pneg %p139
    // Predicated region
    $region29: #{noise_encoder_forward.3} parent=5 // pred_check
      _
    $region30: #{noise_encoder_forward.3} parent=5 // pred_check_branch
      %142 = sbr.rel (%p139) target = $region32
    $region31: #{noise_encoder_forward.3} parent=5 // pred_region
      %s143 = ssub.s32 %s9, 1
      %s144 = smul.u32 4, %s14
      %p145 = scmp.lt.s32.totalorder %s144, 7
      %s146 = scalar_select %p145, %s144, 7
      %s147 = smul.addr %s146, 4
      %s148 = scalar_lea.vmem %s0, %s147
      %p149 = pneg %p35
      %p150 = pneg %p32
      %p151 = pneg %p56
      %p152 = pneg %p53
      %p153 = pneg %p77
      %p154 = pneg %p74
      %p155 = pneg %p103
      %p156 = pneg %p100
      %s157 = smul.u32 4, %s14
      %p158 = scmp.lt.s32.totalorder %s157, 7
      %s159 = scalar_select %p158, %s157, 7
      %s160 = smul.addr %s159, 8
      %s161 = scalar_lea.vmem %s3, %s160
      %s162 = smul.u32 4, %s14
      %p163 = scmp.lt.s32.totalorder %s162, 7
      %s164 = scalar_select %p163, %s162, 7
      %s165 = smul.addr %s164, 4
      %s166 = scalar_lea.vmem %s0, %s165
      %s167 = smul.u32 4, %s14
      %s168 = smul.u32 4, %s14
      %p169 = scmp.lt.s32.totalorder %s168, 7
      %s170 = scalar_select %p169, %s168, 7
      %s171 = smul.addr %s170, 8
      %s172 = scalar_lea.vmem %s3, %s171
      %s173 = smul.u32 4, %s14
      %v174 = vld [vmem:[%s166] sm:$0xff]
      %v175 = vld [vmem:[%s166 + $0x8] sm:$0xff]
      %v176 = vunpack.c.l.bf16 %v174
      %v177 = vunpack.c.h.bf16 %v174
      %v178 = vunpack.c.l.bf16 %v175
      %v179 = vunpack.c.h.bf16 %v175
      %v180 = vld [vmem:[%s1] sm:$0xff]
      %182 = vset.pattern.permute.xlu0 0
      %183 = vperm.xlu0 %182, %v180
      %v184 = vpop.permute.xlu0 %183
      %v186 = vmul.f32 %v176, %v184
      %v187 = vmul.f32 %v177, %v184
      %v188 = vmul.f32 %v178, %v184
      %v189 = vmul.f32 %v179, %v184
      %v190 = vld [vmem:[%s2] sm:$0xff]
      %192 = vset.pattern.permute.xlu0 0
      %193 = vperm.xlu0 %192, %v190
      %v194 = vpop.permute.xlu0 %193
      %v196 = vadd.f32 %v186, %v194
      %v197 = vadd.f32 %v187, %v194
      %v198 = vadd.f32 %v188, %v194
      %v199 = vadd.f32 %v189, %v194
      %vm200 = vcmp.ge.f32.partialorder %v196, 0.0
      %vm201 = vcmp.ge.f32.partialorder %v197, 0.0
      %vm202 = vcmp.ge.f32.partialorder %v198, 0.0
      %vm203 = vcmp.ge.f32.partialorder %v199, 0.0
      %v204 = vmul.f32 %v196, 0.2
      %v205 = vmul.f32 %v197, 0.2
      %v206 = vmul.f32 %v198, 0.2
      %v207 = vmul.f32 %v199, 0.2
      %v208 = vsel %vm200, %v196, %v204
      %v209 = vsel %vm201, %v197, %v205
      %v210 = vsel %vm202, %v198, %v206
      %v211 = vsel %vm203, %v199, %v207
      %212 = vst [vmem:[%s172] sm:$0xff] %v208
      %213 = vst [vmem:[%s172 + $0x8] sm:$0xff] %v209
      %214 = vst [vmem:[%s172 + $0x10] sm:$0xff] %v210
      %215 = vst [vmem:[%s172 + $0x18] sm:$0xff] %v211
      %s216 = smul.u32 4, %s14
      %p217 = scmp.lt.s32.totalorder %s216, 7
      %s218 = scalar_select %p217, %s216, 7
      %s219 = smul.addr %s218, 8
      %s220 = scalar_lea.vmem %s3, %s219
      // Predicated region
      $region33: #{noise_encoder_forward.3} parent=31 // pred_check
        %p221 = pneg %p100
      $region34: #{noise_encoder_forward.3} parent=31 // pred_check_branch
        %223 = sbr.rel (%p221) target = $region36
      $region35: #{noise_encoder_forward.3} parent=31 // pred_region
        %s224 = smul.u32 4, %s14
      $region36: #{noise_encoder_forward.3} parent=31 // pred_fallthru
        _
    $region32: #{noise_encoder_forward.3} parent=5 // pred_fallthru
      _
    %p225 = scmp.le.s32.totalorder 2, %s9
    // Predicated region
    $region37: #{noise_encoder_forward.3} parent=5 // pred_check
      %p226 = pneg %p225
    $region38: #{noise_encoder_forward.3} parent=5 // pred_check_branch
      %228 = sbr.rel (%p226) target = $region40
    $region39: #{noise_encoder_forward.3} parent=5 // pred_region
      %s229 = ssub.s32 %s9, 2
      // Predicated region
      $region41: #{noise_encoder_forward.3} parent=39 // pred_check
        %p230 = pneg %p106
      $region42: #{noise_encoder_forward.3} parent=39 // pred_check_branch
        %232 = sbr.rel (%p230) target = $region44
      $region43: #{noise_encoder_forward.3} parent=39 // pred_region
        %s233 = smul.u32 4, %s15
        %p234 = scmp.lt.s32.totalorder %s233, 7
        %s235 = scalar_select %p234, %s233, 7
        %s236 = smul.addr %s235, 8
        %s237 = scalar_lea.vmem %s3, %s236
      $region44: #{noise_encoder_forward.3} parent=39 // pred_fallthru
        _
    $region40: #{noise_encoder_forward.3} parent=5 // pred_fallthru
      _
  $region6: #{noise_encoder_forward.3} parent=0 // loop_footer
    %s13 = sadd.s32 1, %s9
  $region7: #{noise_encoder_forward.3} parent=0 // loop_footer_branch
    %8 = sbr.rel target = $region3
  $region8: #{noise_encoder_forward.3} parent=0 // loop_exit
    _

// kernel: noise_encoder_forward.2
$region0: #{noise_encoder_forward.2}
  #allocation0 [shape = 'u32[]', space=smem, size = 0x4, offset = 0x4, fixed_abs, tag = 'smem constant byte address 0x4 - core index']
  #allocation1 [shape = 'u32[72,128]{1,0:T(1,128)}', space=vmem, size = 0x9000, scoped, tag = 'internal scratch']
  #allocation2 [shape = 'bf16[4,640]{1,0:T(4,128)(2,1)}', space=vmem, size = 0x1400, scoped, tag = 'scratch operand']
  %s0 = inlined_call_operand.vmem [shape: bf16[4,1152], index: 0, kind: input, shape index: {}]
  %s1 = inlined_call_operand.vmem [shape: bf16[2,4,128], index: 1, kind: input, shape index: {}]
  %s2 = inlined_call_operand.vmem [shape: bf16[9,8,4], index: 2, kind: input, shape index: {}]
  %s3 = inlined_call_operand.vmem [shape: bf16[1,1024], index: 3, kind: input, shape index: {}]
  %s4 = inlined_call_operand.vmem [shape: bf16[8,1024], index: 4, kind: output, shape index: {0}]
  %s5 = inlined_call_operand.vmem [shape: f32[2,8,2], index: 5, kind: output, shape index: {1}]
  %6 = xla_tuple %s4, %s5
  %s7 = sld [smem:[#allocation0]]
  $region57: #{noise_encoder_forward.2} parent=0
    _
  %s9 = ssub.s32 1, %s7
  %s10 = scalar_select 0, %s9, %s7
  loop: start=0, step=1, limit=4
  $region2: #{noise_encoder_forward.2} parent=0 // loop_pre_header
    _
  $region3: #{noise_encoder_forward.2} parent=0 // loop_header
    %s12 = sphi 0, %s16
    %p13 = scmp.ge.s32.totalorder %s12, 4
    %s22 = sphi 0, %s24
    %s25 = sphi 0, %s22
    %s26 = sphi 0, %s25
    %s42 = sphi 0, %s26
    %s48 = sphi 0, %s50
    %s51 = sphi 0, %s48
    %s52 = sphi 0, %s51
    %s68 = sphi 0, %s52
    %s72 = sphi 0, %s72
    %s74 = sphi 0, %s72
    %s75 = sphi 0, %s74
    %s89 = sphi 0, %s75
    %s95 = sphi 0, %s97
    %s98 = sphi 0, %s95
    %s99 = sphi 0, %s98
    %s115 = sphi 0, %s99
    %s121 = sphi 0, %s123
    %s124 = sphi 0, %s121
    %s125 = sphi 0, %s124
    %s141 = sphi 0, %s125
    %s147 = sphi 0, %s149
    %s150 = sphi 0, %s147
    %s151 = sphi 0, %s150
    %s167 = sphi 0, %s151
  $region4: #{noise_encoder_forward.2} parent=0 // loop_header_branch
    %15 = sbr.rel (%p13) target = $region8
  $region5: #{noise_encoder_forward.2} parent=0 // loop_body
    %s17 = ssub.s32 %s12, 1
    %s18 = ssub.s32 %s12, 2
    %s19 = sadd.s32 %s12, 1
    %s20 = ssub.s32 %s12, %s19
    %p21 = scmp.eq.s32.totalorder %s20, 0
    %s23 = sadd.s32 %s22, 1
    %s24 = scalar_select %p21, %s22, %s23
    %p27 = pneg %p21
    %p28 = scmp.eq.s32.totalorder %s12, 1
    %p29 = por %p27, %p28
    %p30 = scmp.ne.s32.totalorder %s22, %s25
    %p31 = scmp.eq.s32.totalorder %s12, 0
    %p32 = por %p30, %p31
    %p33 = scmp.ne.s32.totalorder %s22, %s25
    %p34 = scmp.eq.s32.totalorder %s17, 1
    %p35 = por %p33, %p34
    %p36 = scmp.ne.s32.totalorder %s25, %s26
    %p37 = scmp.eq.s32.totalorder %s17, 0
    %p38 = por %p36, %p37
    %p39 = scmp.ne.s32.totalorder %s25, %s26
    %p40 = scmp.eq.s32.totalorder %s18, 1
    %p41 = por %p39, %p40
    %p43 = scmp.ne.s32.totalorder %s26, %s42
    %p44 = scmp.eq.s32.totalorder %s18, 0
    %p45 = por %p43, %p44
    %s46 = ssub.s32 %s12, %s19
    %p47 = scmp.eq.s32.totalorder %s46, 0
    %s49 = sadd.s32 %s48, 1
    %s50 = scalar_select %p47, %s48, %s49
    %p53 = pneg %p47
    %p54 = scmp.eq.s32.totalorder %s12, 1
    %p55 = por %p53, %p54
    %p56 = scmp.ne.s32.totalorder %s48, %s51
    %p57 = scmp.eq.s32.totalorder %s12, 0
    %p58 = por %p56, %p57
    %p59 = scmp.ne.s32.totalorder %s48, %s51
    %p60 = scmp.eq.s32.totalorder %s17, 1
    %p61 = por %p59, %p60
    %p62 = scmp.ne.s32.totalorder %s51, %s52
    %p63 = scmp.eq.s32.totalorder %s17, 0
    %p64 = por %p62, %p63
    %p65 = scmp.ne.s32.totalorder %s51, %s52
    %p66 = scmp.eq.s32.totalorder %s18, 1
    %p67 = por %p65, %p66
    %p69 = scmp.ne.s32.totalorder %s52, %s68
    %p70 = scmp.eq.s32.totalorder %s18, 0
    %p71 = por %p69, %p70
    %s73 = sadd.s32 %s72, 1
    %p76 = scmp.eq.s32.totalorder %s12, 1
    %p77 = scmp.ne.s32.totalorder %s72, %s74
    %p78 = scmp.eq.s32.totalorder %s12, 0
    %p79 = por %p77, %p78
    %p80 = scmp.ne.s32.totalorder %s72, %s74
    %p81 = scmp.eq.s32.totalorder %s17, 1
    %p82 = por %p80, %p81
    %p83 = scmp.ne.s32.totalorder %s74, %s75
    %p84 = scmp.eq.s32.totalorder %s17, 0
    %p85 = por %p83, %p84
    %p86 = scmp.ne.s32.totalorder %s74, %s75
    %p87 = scmp.eq.s32.totalorder %s18, 1
    %p88 = por %p86, %p87
    %p90 = scmp.ne.s32.totalorder %s75, %s89
    %p91 = scmp.eq.s32.totalorder %s18, 0
    %p92 = por %p90, %p91
    %s93 = ssub.s32 %s12, %s19
    %p94 = scmp.eq.s32.totalorder %s93, 0
    %s96 = sadd.s32 %s95, 1
    %s97 = scalar_select %p94, %s95, %s96
    %p100 = pneg %p94
    %p101 = scmp.eq.s32.totalorder %s12, 1
    %p102 = por %p100, %p101
    %p103 = scmp.ne.s32.totalorder %s95, %s98
    %p104 = scmp.eq.s32.totalorder %s12, 0
    %p105 = por %p103, %p104
    %p106 = scmp.ne.s32.totalorder %s95, %s98
    %p107 = scmp.eq.s32.totalorder %s17, 1
    %p108 = por %p106, %p107
    %p109 = scmp.ne.s32.totalorder %s98, %s99
    %p110 = scmp.eq.s32.totalorder %s17, 0
    %p111 = por %p109, %p110
    %p112 = scmp.ne.s32.totalorder %s98, %s99
    %p113 = scmp.eq.s32.totalorder %s18, 1
    %p114 = por %p112, %p113
    %p116 = scmp.ne.s32.totalorder %s99, %s115
    %p117 = scmp.eq.s32.totalorder %s18, 0
    %p118 = por %p116, %p117
    %s119 = ssub.s32 %s12, %s19
    %p120 = scmp.eq.s32.totalorder %s119, 0
    %s122 = sadd.s32 %s121, 1
    %s123 = scalar_select %p120, %s121, %s122
    %p126 = pneg %p120
    %p127 = scmp.eq.s32.totalorder %s12, 1
    %p128 = por %p126, %p127
    %p129 = scmp.ne.s32.totalorder %s121, %s124
    %p130 = scmp.eq.s32.totalorder %s12, 0
    %p131 = por %p129, %p130
    %p132 = scmp.ne.s32.totalorder %s121, %s124
    %p133 = scmp.eq.s32.totalorder %s17, 1
    %p134 = por %p132, %p133
    %p135 = scmp.ne.s32.totalorder %s124, %s125
    %p136 = scmp.eq.s32.totalorder %s17, 0
    %p137 = por %p135, %p136
    %p138 = scmp.ne.s32.totalorder %s124, %s125
    %p139 = scmp.eq.s32.totalorder %s18, 1
    %p140 = por %p138, %p139
    %p142 = scmp.ne.s32.totalorder %s125, %s141
    %p143 = scmp.eq.s32.totalorder %s18, 0
    %p144 = por %p142, %p143
    %s145 = ssub.s32 %s12, %s19
    %p146 = scmp.eq.s32.totalorder %s145, 0
    %s148 = sadd.s32 %s147, 1
    %s149 = scalar_select %p146, %s147, %s148
    %p152 = pneg %p146
    %p153 = scmp.eq.s32.totalorder %s12, 1
    %p154 = por %p152, %p153
    %p155 = scmp.ne.s32.totalorder %s147, %s150
    %p156 = scmp.eq.s32.totalorder %s12, 0
    %p157 = por %p155, %p156
    %p158 = scmp.ne.s32.totalorder %s147, %s150
    %p159 = scmp.eq.s32.totalorder %s17, 1
    %p160 = por %p158, %p159
    %p161 = scmp.ne.s32.totalorder %s150, %s151
    %p162 = scmp.eq.s32.totalorder %s17, 0
    %p163 = por %p161, %p162
    %p164 = scmp.ne.s32.totalorder %s150, %s151
    %p165 = scmp.eq.s32.totalorder %s18, 1
    %p166 = por %p164, %p165
    %p168 = scmp.ne.s32.totalorder %s151, %s167
    %p169 = scmp.eq.s32.totalorder %s18, 0
    %p170 = por %p168, %p169
    %p171 = scmp.le.s32.totalorder 1, %s12
    %p172 = scmp.lt.s32.totalorder %s12, 3
    %p173 = pnand %p171, %p172
    %p174 = pneg %p173
    // Predicated region
    $region9: #{noise_encoder_forward.2} parent=5 // pred_check
      _
    $region10: #{noise_encoder_forward.2} parent=5 // pred_check_branch
      %176 = sbr.rel (%p173) target = $region12
    $region11: #{noise_encoder_forward.2} parent=5 // pred_region
      %s177 = ssub.s32 %s12, 1
      // Predicated region
      $region13: #{noise_encoder_forward.2} parent=11 // pred_check
        %p178 = pneg %p85
      $region14: #{noise_encoder_forward.2} parent=11 // pred_check_branch
        %180 = sbr.rel (%p178) target = $region16
      $region15: #{noise_encoder_forward.2} parent=11 // pred_region
        _
      $region16: #{noise_encoder_forward.2} parent=11 // pred_fallthru
        _
    $region12: #{noise_encoder_forward.2} parent=5 // pred_fallthru
      _
    %p181 = scmp.lt.s32.totalorder %s12, 2
    // Predicated region
    $region17: #{noise_encoder_forward.2} parent=5 // pred_check
      %p182 = pneg %p181
    $region18: #{noise_encoder_forward.2} parent=5 // pred_check_branch
      %184 = sbr.rel (%p182) target = $region20
    $region19: #{noise_encoder_forward.2} parent=5 // pred_region
      // Predicated region
      $region21: #{noise_encoder_forward.2} parent=19 // pred_check
        %p185 = pneg %p32
      $region22: #{noise_encoder_forward.2} parent=19 // pred_check_branch
        %187 = sbr.rel (%p185) target = $region24
      $region23: #{noise_encoder_forward.2} parent=19 // pred_region
        %s188 = smul.u32 4, %s12
        %s189 = ssub.s32 9, %s188
        %p190 = scmp.lt.s32.totalorder %s189, 4
        %s191 = scalar_select %p190, %s189, 4
        %s192 = smul.u32 2, %s191
        %p193 = scmp.lt.s32.totalorder %s188, 8
        %s194 = scalar_select %p193, %s188, 8
        %s195 = smul.addr %s194, 2
        %s196 = scalar_lea.vmem %s0, %s195
        %s197 = smul.u32 4, %s12
        %s198 = ssub.s32 9, %s197
        %p199 = scmp.lt.s32.totalorder %s198, 4
        %s200 = scalar_select %p199, %s198, 4
        %s201 = smul.u32 2, %s200
      $region24: #{noise_encoder_forward.2} parent=19 // pred_fallthru
        _
      // Predicated region
      $region25: #{noise_encoder_forward.2} parent=19 // pred_check
        %p202 = pneg %p58
      $region26: #{noise_encoder_forward.2} parent=19 // pred_check_branch
        %204 = sbr.rel (%p202) target = $region28
      $region27: #{noise_encoder_forward.2} parent=19 // pred_region
        %p205 = scmp.lt.s32.totalorder %s12, 1
        %s206 = scalar_select %p205, %s12, 1
        %s207 = smul.addr %s206, 2
        %s208 = scalar_lea.vmem %s1, %s207
      $region28: #{noise_encoder_forward.2} parent=19 // pred_fallthru
        _
      // Predicated region
      $region29: #{noise_encoder_forward.2} parent=19 // pred_check
        %p209 = pneg %p105
      $region30: #{noise_encoder_forward.2} parent=19 // pred_check_branch
        %211 = sbr.rel (%p209) target = $region32
      $region31: #{noise_encoder_forward.2} parent=19 // pred_region
        %s212 = smul.u32 4, %s12
        %p213 = scmp.lt.s32.totalorder %s212, 7
        %s214 = scalar_select %p213, %s212, 7
        %s215 = scalar_lea.vmem %s3, %s214
        %s216 = smul.u32 4, %s12
      $region32: #{noise_encoder_forward.2} parent=19 // pred_fallthru
        _
    $region20: #{noise_encoder_forward.2} parent=5 // pred_fallthru
      _
    %p217 = scmp.le.s32.totalorder 1, %s12
    %p218 = scmp.lt.s32.totalorder %s12, 3
    %p219 = pnand %p217, %p218
    %p220 = pneg %p219
    // Predicated region
    $region33: #{noise_encoder_forward.2} parent=5 // pred_check
      _
    $region34: #{noise_encoder_forward.2} parent=5 // pred_check_branch
      %222 = sbr.rel (%p219) target = $region36
    $region35: #{noise_encoder_forward.2} parent=5 // pred_region
      %s223 = ssub.s32 %s12, 1
      %s224 = smul.u32 4, %s17
      %s225 = ssub.s32 9, %s224
      %p226 = scmp.lt.s32.totalorder %s225, 4
      %s227 = scalar_select %p226, %s225, 4
      %s228 = smul.u32 2, %s227
      %p229 = scmp.lt.s32.totalorder %s224, 8
      %s230 = scalar_select %p229, %s224, 8
      %s231 = smul.addr %s230, 2
      %s232 = scalar_lea.vmem %s0, %s231
      %p233 = pneg %p38
      %p234 = pneg %p35
      %p235 = scmp.lt.s32.totalorder %s17, 1
      %s236 = scalar_select %p235, %s17, 1
      %s237 = smul.addr %s236, 2
      %s238 = scalar_lea.vmem %s1, %s237
      %p239 = pneg %p64
      %p240 = pneg %p61
      %p241 = pneg %p85
      %p242 = pneg %p82
      %s243 = smul.u32 4, %s17
      %p244 = scmp.lt.s32.totalorder %s243, 7
      %s245 = scalar_select %p244, %s243, 7
      %s246 = scalar_lea.vmem %s3, %s245
      %p247 = pneg %p111
      %p248 = pneg %p108
      %p249 = pneg %p137
      %p250 = pneg %p134
      %s251 = smul.u32 4, %s17
      %p252 = scmp.lt.s32.totalorder %s251, 7
      %s253 = scalar_select %p252, %s251, 7
      %s254 = smul.addr %s253, 4
      %s255 = scalar_lea.vmem %s4, %s254
      %p256 = pneg %p163
      %p257 = pneg %p160
      %p258 = scmp.lt.s32.totalorder %s17, 1
      %s259 = scalar_select %p258, %s17, 1
      %s260 = smul.addr %s259, 8
      %s261 = scalar_lea.vmem %s5, %s260
      %s262 = smul.u32 4, %s17
      %s263 = ssub.s32 9, %s262
      %p264 = scmp.lt.s32.totalorder %s263, 4
      %s265 = scalar_select %p264, %s263, 4
      %s266 = smul.u32 2, %s265
      %p267 = scmp.lt.s32.totalorder %s262, 8
      %s268 = scalar_select %p267, %s262, 8
      %s269 = smul.addr %s268, 2
      %s270 = scalar_lea.vmem %s0, %s269
      %s271 = smul.u32 4, %s17
      %s272 = ssub.s32 9, %s271
      %p273 = scmp.lt.s32.totalorder %s272, 4
      %s274 = scalar_select %p273, %s272, 4
      %s275 = smul.u32 2, %s274
      %p276 = scmp.lt.s32.totalorder %s17, 1
      %s277 = scalar_select %p276, %s17, 1
      %s278 = smul.addr %s277, 2
      %s279 = scalar_lea.vmem %s1, %s278
      %s280 = smul.u32 4, %s17
      %p281 = scmp.lt.s32.totalorder %s280, 7
      %s282 = scalar_select %p281, %s280, 7
      %s283 = scalar_lea.vmem %s3, %s282
      %s284 = smul.u32 4, %s17
      %s285 = smul.u32 4, %s17
      %p286 = scmp.lt.s32.totalorder %s285, 7
      %s287 = scalar_select %p286, %s285, 7
      %s288 = smul.addr %s287, 4
      %s289 = scalar_lea.vmem %s4, %s288
      %s290 = smul.u32 4, %s17
      %p291 = scmp.lt.s32.totalorder %s17, 1
      %s292 = scalar_select %p291, %s17, 1
      %s293 = smul.addr %s292, 8
      %s294 = scalar_lea.vmem %s5, %s293
      %v296 = vld [vmem:[%s270] sm:$0xff]
      %297 = vst [vmem:[#allocation2] sm:$0xff] %v296
      %v298 = vld [vmem:[%s279] sm:$0x3]
      %299 = vst [vmem:[#allocation2 + $0x8] sm:$0x3] %v298
      %v300 = vld [vmem:[#allocation2] sm:$0xff]
      %v301 = vld [vmem:[%s2] sm:$0xf]
      %v302 = vld [vmem:[#allocation2] sm:$0xff]
      %v303 = vld [vmem:[#allocation2 + $0x8] sm:$0x3]
      %s304 = scalar_lea.vmem %s2, 4
      %v305 = vld [vmem:[%s304] sm:$0xf]
      %307 = vst [vmem:[#allocation1] ss:$4 sm:$0xff] %v302
      %s309 = scalar_lea.vmem [#allocation1], 32
      %310 = vst [vmem:[%s309] ss:$4 sm:$0xff] %v303
      %v311 = vld.sshfl [vmem:[#allocation1] sm:$0xff pattern:$0x73625140]
      %v313 = vld.sshfl [vmem:[#allocation1 + $0x8] sm:$0xff pattern:$0x73625140]
      %v315 = vld.sshfl [vmem:[#allocation1 + $0x10] sm:$0xff pattern:$0x73625140]
      %v317 = vld.sshfl [vmem:[#allocation1 + $0x18] sm:$0xff pattern:$0x73625140]
      %v319 = vld.sshfl [vmem:[#allocation1 + $0x20] sm:$0xff pattern:$0x73625140]
      %321 = vrot.lane.b32.xlu0 %v311, 127
      %v322 = vpop.permute.xlu0 %321
      %323 = vrot.lane.b32.xlu0 %v313, 127
      %v324 = vpop.permute.xlu0 %323
      %325 = vrot.lane.b32.xlu0 %v315, 127
      %v326 = vpop.permute.xlu0 %325
      %327 = vrot.lane.b32.xlu0 %v317, 127
      %v328 = vpop.permute.xlu0 %327
      %329 = vrot.lane.b32.xlu0 %v319, 127
      %v330 = vpop.permute.xlu0 %329
      %vm331 = vcmask 1039360
      %v332 = vsel %vm331, %v322, %v324
      %v333 = vsel %vm331, %v324, %v326
      %v334 = vsel %vm331, %v326, %v328
      %v335 = vsel %vm331, %v328, %v330
      %vm336 = vcmask 31744
      %v338 = vsel %vm336, %v305, 0
      %vm340 = vcmask 1041408
      %v342 = vsel %vm340, %v332, 0
      %v345 = vsel %vm340, %v333, 0
      %v348 = vsel %vm340, %v334, 0
      %v351 = vsel %vm340, %v335, 0
      %353 = vmatpush.bf16.msra.mxu0 0
      %354 = vmatpush.bf16.msra.mxu0 0
      %355 = vmatpush.bf16.msra.mxu0 0
      %356 = vmatpush.bf16.msra.mxu0 0
      %357 = vmatpush.bf16.msra.mxu0 0
      %358 = vmatpush.bf16.msra.mxu0 0
      %359 = vmatpush.bf16.msra.mxu0 0
      %360 = vmatpush.bf16.msra.mxu0 %v342
      %361 = vmatmul.bf16.gmra.mxu0 %v338
      %v362 = vpop.f32.mrf.mxu0
      %v363 = vadd.f32 0.0, %v362
      %v364 = vpop.f32.mrf.mxu0
      %365 = vdwg.mxu0
      %366 = vmatpush.bf16.msra.mxu0 0
      %367 = vmatpush.bf16.msra.mxu0 0
      %368 = vmatpush.bf16.msra.mxu0 0
      %369 = vmatpush.bf16.msra.mxu0 0
      %370 = vmatpush.bf16.msra.mxu0 0
      %371 = vmatpush.bf16.msra.mxu0 0
      %372 = vmatpush.bf16.msra.mxu0 0
      %373 = vmatpush.bf16.msra.mxu0 %v345
      %374 = vmatmul.bf16.gmra.mxu0 %v338
      %v375 = vpop.f32.mrf.mxu0
      %v376 = vadd.f32 0.0, %v375
      %v377 = vpop.f32.mrf.mxu0
      %378 = vdwg.mxu0
      %379 = vmatpush.bf16.msra.mxu0 0
      %380 = vmatpush.bf16.msra.mxu0 0
      %381 = vmatpush.bf16.msra.mxu0 0
      %382 = vmatpush.bf16.msra.mxu0 0
      %383 = vmatpush.bf16.msra.mxu0 0
      %384 = vmatpush.bf16.msra.mxu0 0
      %385 = vmatpush.bf16.msra.mxu0 0
      %386 = vmatpush.bf16.msra.mxu0 %v348
      %387 = vmatmul.bf16.gmra.mxu0 %v338
      %v388 = vpop.f32.mrf.mxu0
      %v389 = vadd.f32 0.0, %v388
      %v390 = vpop.f32.mrf.mxu0
      %391 = vdwg.mxu0
      %392 = vmatpush.bf16.msra.mxu0 0
      %393 = vmatpush.bf16.msra.mxu0 0
      %394 = vmatpush.bf16.msra.mxu0 0
      %395 = vmatpush.bf16.msra.mxu0 0
      %396 = vmatpush.bf16.msra.mxu0 0
      %397 = vmatpush.bf16.msra.mxu0 0
      %398 = vmatpush.bf16.msra.mxu0 0
      %399 = vmatpush.bf16.msra.mxu0 %v351
      %400 = vmatmul.bf16.gmra.mxu0 %v338
      %v401 = vpop.f32.mrf.mxu0
      %v402 = vadd.f32 0.0, %v401
      %v403 = vpop.f32.mrf.mxu0
      %404 = vdwg.mxu0
      %406 = vst [vmem:[#allocation1] ss:$4 sm:$0xff] %v300
      %v407 = vld.sshfl [vmem:[#allocation1] sm:$0xff pattern:$0x73625140]
      %v408 = vld.sshfl [vmem:[#allocation1 + $0x8] sm:$0xff pattern:$0x73625140]
      %v409 = vld.sshfl [vmem:[#allocation1 + $0x10] sm:$0xff pattern:$0x73625140]
      %v410 = vld.sshfl [vmem:[#allocation1 + $0x18] sm:$0xff pattern:$0x73625140]
      %v412 = vsel %vm336, %v301, 0
      %v414 = vsel %vm340, %v407, 0
      %v416 = vsel %vm340, %v408, 0
      %v418 = vsel %vm340, %v409, 0
      %v420 = vsel %vm340, %v410, 0
      %422 = vmatpush.bf16.msra.mxu0 0
      %423 = vmatpush.bf16.msra.mxu0 0
      %424 = vmatpush.bf16.msra.mxu0 0
      %425 = vmatpush.bf16.msra.mxu0 0
      %426 = vmatpush.bf16.msra.mxu0 0
      %427 = vmatpush.bf16.msra.mxu0 0
      %428 = vmatpush.bf16.msra.mxu0 0
      %429 = vmatpush.bf16.msra.mxu0 %v414
      %430 = vmatmul.bf16.gmra.mxu0 %v412
      %v431 = vpop.f32.mrf.mxu0
      %v432 = vadd.f32 %v363, %v431
      %v433 = vpop.f32.mrf.mxu0
      %434 = vdwg.mxu0
      %435 = vmatpush.bf16.msra.mxu0 0
      %436 = vmatpush.bf16.msra.mxu0 0
      %437 = vmatpush.bf16.msra.mxu0 0
      %438 = vmatpush.bf16.msra.mxu0 0
      %439 = vmatpush.bf16.msra.mxu0 0
      %440 = vmatpush.bf16.msra.mxu0 0
      %441 = vmatpush.bf16.msra.mxu0 0
      %442 = vmatpush.bf16.msra.mxu0 %v416
      %443 = vmatmul.bf16.gmra.mxu0 %v412
      %v444 = vpop.f32.mrf.mxu0
      %v445 = vadd.f32 %v376, %v444
      %v446 = vpop.f32.mrf.mxu0
      %447 = vdwg.mxu0
      %448 = vmatpush.bf16.msra.mxu0 0
      %449 = vmatpush.bf16.msra.mxu0 0
      %450 = vmatpush.bf16.msra.mxu0 0
      %451 = vmatpush.bf16.msra.mxu0 0
      %452 = vmatpush.bf16.msra.mxu0 0
      %453 = vmatpush.bf16.msra.mxu0 0
      %454 = vmatpush.bf16.msra.mxu0 0
      %455 = vmatpush.bf16.msra.mxu0 %v418
      %456 = vmatmul.bf16.gmra.mxu0 %v412
      %v457 = vpop.f32.mrf.mxu0
      %v458 = vadd.f32 %v389, %v457
      %v459 = vpop.f32.mrf.mxu0
      %460 = vdwg.mxu0
      %461 = vmatpush.bf16.msra.mxu0 0
      %462 = vmatpush.bf16.msra.mxu0 0
      %463 = vmatpush.bf16.msra.mxu0 0
      %464 = vmatpush.bf16.msra.mxu0 0
      %465 = vmatpush.bf16.msra.mxu0 0
      %466 = vmatpush.bf16.msra.mxu0 0
      %467 = vmatpush.bf16.msra.mxu0 0
      %468 = vmatpush.bf16.msra.mxu0 %v420
      %469 = vmatmul.bf16.gmra.mxu0 %v412
      %v470 = vpop.f32.mrf.mxu0
      %v471 = vadd.f32 %v402, %v470
      %v472 = vpop.f32.mrf.mxu0
      %473 = vdwg.mxu0
      %v474 = vld [vmem:[#allocation2] sm:$0xff]
      %v475 = vld [vmem:[#allocation2 + $0x8] sm:$0x3]
      %s476 = scalar_lea.vmem %s2, 8
      %v477 = vld [vmem:[%s476] sm:$0xf]
      %479 = vst [vmem:[#allocation1] ss:$4 sm:$0xff] %v474
      %s481 = scalar_lea.vmem [#allocation1], 32
      %482 = vst [vmem:[%s481] ss:$4 sm:$0xff] %v475
      %v483 = vld.sshfl [vmem:[#allocation1] sm:$0xff pattern:$0x73625140]
      %v485 = vld.sshfl [vmem:[#allocation1 + $0x8] sm:$0xff pattern:$0x73625140]
      %v487 = vld.sshfl [vmem:[#allocation1 + $0x10] sm:$0xff pattern:$0x73625140]
      %v489 = vld.sshfl [vmem:[#allocation1 + $0x18] sm:$0xff pattern:$0x73625140]
      %v491 = vld.sshfl [vmem:[#allocation1 + $0x20] sm:$0xff pattern:$0x73625140]
      %493 = vrot.lane.b32.xlu0 %v483, 126
      %v494 = vpop.permute.xlu0 %493
      %495 = vrot.lane.b32.xlu0 %v485, 126
      %v496 = vpop.permute.xlu0 %495
      %497 = vrot.lane.b32.xlu0 %v487, 126
      %v498 = vpop.permute.xlu0 %497
      %499 = vrot.lane.b32.xlu0 %v489, 126
      %v500 = vpop.permute.xlu0 %499
      %501 = vrot.lane.b32.xlu0 %v491, 126
      %v502 = vpop.permute.xlu0 %501
      %vm503 = vcmask 1031168
      %v504 = vsel %vm503, %v494, %v496
      %v505 = vsel %vm503, %v496, %v498
      %v506 = vsel %vm503, %v498, %v500
      %v507 = vsel %vm503, %v500, %v502
      %v509 = vsel %vm336, %v477, 0
      %v512 = vsel %vm340, %v504, 0
      %v515 = vsel %vm340, %v505, 0
      %v518 = vsel %vm340, %v506, 0
      %v521 = vsel %vm340, %v507, 0
      %523 = vmatpush.bf16.msra.mxu0 0
      %524 = vmatpush.bf16.msra.mxu0 0
      %525 = vmatpush.bf16.msra.mxu0 0
      %526 = vmatpush.bf16.msra.mxu0 0
      %527 = vmatpush.bf16.msra.mxu0 0
      %528 = vmatpush.bf16.msra.mxu0 0
      %529 = vmatpush.bf16.msra.mxu0 0
      %530 = vmatpush.bf16.msra.mxu0 %v512
      %531 = vmatmul.bf16.gmra.mxu0 %v509
      %v532 = vpop.f32.mrf.mxu0
      %v533 = vadd.f32 0.0, %v532
      %v534 = vpop.f32.mrf.mxu0
      %535 = vdwg.mxu0
      %536 = vmatpush.bf16.msra.mxu0 0
      %537 = vmatpush.bf16.msra.mxu0 0
      %538 = vmatpush.bf16.msra.mxu0 0
      %539 = vmatpush.bf16.msra.mxu0 0
      %540 = vmatpush.bf16.msra.mxu0 0
      %541 = vmatpush.bf16.msra.mxu0 0
      %542 = vmatpush.bf16.msra.mxu0 0
      %543 = vmatpush.bf16.msra.mxu0 %v515
      %544 = vmatmul.bf16.gmra.mxu0 %v509
      %v545 = vpop.f32.mrf.mxu0
      %v546 = vadd.f32 0.0, %v545
      %v547 = vpop.f32.mrf.mxu0
      %548 = vdwg.mxu0
      %549 = vmatpush.bf16.msra.mxu0 0
      %550 = vmatpush.bf16.msra.mxu0 0
      %551 = vmatpush.bf16.msra.mxu0 0
      %552 = vmatpush.bf16.msra.mxu0 0
      %553 = vmatpush.bf16.msra.mxu0 0
      %554 = vmatpush.bf16.msra.mxu0 0
      %555 = vmatpush.bf16.msra.mxu0 0
      %556 = vmatpush.bf16.msra.mxu0 %v518
      %557 = vmatmul.bf16.gmra.mxu0 %v509
      %v558 = vpop.f32.mrf.mxu0
      %v559 = vadd.f32 0.0, %v558
      %v560 = vpop.f32.mrf.mxu0
      %561 = vdwg.mxu0
      %562 = vmatpush.bf16.msra.mxu0 0
      %563 = vmatpush.bf16.msra.mxu0 0
      %564 = vmatpush.bf16.msra.mxu0 0
      %565 = vmatpush.bf16.msra.mxu0 0
      %566 = vmatpush.bf16.msra.mxu0 0
      %567 = vmatpush.bf16.msra.mxu0 0
      %568 = vmatpush.bf16.msra.mxu0 0
      %569 = vmatpush.bf16.msra.mxu0 %v521
      %570 = vmatmul.bf16.gmra.mxu0 %v509
      %v571 = vpop.f32.mrf.mxu0
      %v572 = vadd.f32 0.0, %v571
      %v573 = vpop.f32.mrf.mxu0
      %574 = vdwg.mxu0
      %v575 = vadd.f32 %v432, %v533
      %v576 = vadd.f32 %v445, %v546
      %v577 = vadd.f32 %v458, %v559
      %v578 = vadd.f32 %v471, %v572
      %v579 = vld [vmem:[#allocation2] sm:$0xff]
      %v580 = vld [vmem:[#allocation2 + $0x8] sm:$0x3]
      %s581 = scalar_lea.vmem %s2, 12
      %v582 = vld [vmem:[%s581] sm:$0xf]
      %584 = vst [vmem:[#allocation1] ss:$4 sm:$0xff] %v579
      %s586 = scalar_lea.vmem [#allocation1], 32
      %587 = vst [vmem:[%s586] ss:$4 sm:$0xff] %v580
      %v588 = vld.sshfl [vmem:[#allocation1] sm:$0xff pattern:$0x73625140]
      %v590 = vld.sshfl [vmem:[#allocation1 + $0x8] sm:$0xff pattern:$0x73625140]
      %v592 = vld.sshfl [vmem:[#allocation1 + $0x10] sm:$0xff pattern:$0x73625140]
      %v594 = vld.sshfl [vmem:[#allocation1 + $0x18] sm:$0xff pattern:$0x73625140]
      %v596 = vld.sshfl [vmem:[#allocation1 + $0x20] sm:$0xff pattern:$0x73625140]
      %598 = vrot.lane.b32.xlu0 %v588, 110
      %v599 = vpop.permute.xlu0 %598
      %600 = vrot.lane.b32.xlu0 %v590, 110
      %v601 = vpop.permute.xlu0 %600
      %602 = vrot.lane.b32.xlu0 %v592, 110
      %v603 = vpop.permute.xlu0 %602
      %604 = vrot.lane.b32.xlu0 %v594, 110
      %v605 = vpop.permute.xlu0 %604
      %606 = vrot.lane.b32.xlu0 %v596, 110
      %v607 = vpop.permute.xlu0 %606
      %vm608 = vcmask 900096
      %v609 = vsel %vm608, %v599, %v601
      %v610 = vsel %vm608, %v601, %v603
      %v611 = vsel %vm608, %v603, %v605
      %v612 = vsel %vm608, %v605, %v607
      %v614 = vsel %vm336, %v582, 0
      %v617 = vsel %vm340, %v609, 0
      %v620 = vsel %vm340, %v610, 0
      %v623 = vsel %vm340, %v611, 0
      %v626 = vsel %vm340, %v612, 0
      %628 = vmatpush.bf16.msra.mxu0 0
      %629 = vmatpush.bf16.msra.mxu0 0
      %630 = vmatpush.bf16.msra.mxu0 0
      %631 = vmatpush.bf16.msra.mxu0 0
      %632 = vmatpush.bf16.msra.mxu0 0
      %633 = vmatpush.bf16.msra.mxu0 0
      %634 = vmatpush.bf16.msra.mxu0 0
      %635 = vmatpush.bf16.msra.mxu0 %v617
      %636 = vmatmul.bf16.gmra.mxu0 %v614
      %v637 = vpop.f32.mrf.mxu0
      %v638 = vadd.f32 0.0, %v637
      %v639 = vpop.f32.mrf.mxu0
      %640 = vdwg.mxu0
      %641 = vmatpush.bf16.msra.mxu0 0
      %642 = vmatpush.bf16.msra.mxu0 0
      %643 = vmatpush.bf16.msra.mxu0 0
      %644 = vmatpush.bf16.msra.mxu0 0
      %645 = vmatpush.bf16.msra.mxu0 0
      %646 = vmatpush.bf16.msra.mxu0 0
      %647 = vmatpush.bf16.msra.mxu0 0
      %648 = vmatpush.bf16.msra.mxu0 %v620
      %649 = vmatmul.bf16.gmra.mxu0 %v614
      %v650 = vpop.f32.mrf.mxu0
      %v651 = vadd.f32 0.0, %v650
      %v652 = vpop.f32.mrf.mxu0
      %653 = vdwg.mxu0
      %654 = vmatpush.bf16.msra.mxu0 0
      %655 = vmatpush.bf16.msra.mxu0 0
      %656 = vmatpush.bf16.msra.mxu0 0
      %657 = vmatpush.bf16.msra.mxu0 0
      %658 = vmatpush.bf16.msra.mxu0 0
      %659 = vmatpush.bf16.msra.mxu0 0
      %660 = vmatpush.bf16.msra.mxu0 0
      %661 = vmatpush.bf16.msra.mxu0 %v623
      %662 = vmatmul.bf16.gmra.mxu0 %v614
      %v663 = vpop.f32.mrf.mxu0
      %v664 = vadd.f32 0.0, %v663
      %v665 = vpop.f32.mrf.mxu0
      %666 = vdwg.mxu0
      %667 = vmatpush.bf16.msra.mxu0 0
      %668 = vmatpush.bf16.msra.mxu0 0
      %669 = vmatpush.bf16.msra.mxu0 0
      %670 = vmatpush.bf16.msra.mxu0 0
      %671 = vmatpush.bf16.msra.mxu0 0
      %672 = vmatpush.bf16.msra.mxu0 0
      %673 = vmatpush.bf16.msra.mxu0 0
      %674 = vmatpush.bf16.msra.mxu0 %v626
      %675 = vmatmul.bf16.gmra.mxu0 %v614
      %v676 = vpop.f32.mrf.mxu0
      %v677 = vadd.f32 0.0, %v676
      %v678 = vpop.f32.mrf.mxu0
      %679 = vdwg.mxu0
      %v680 = vadd.f32 %v575, %v638
      %v681 = vadd.f32 %v576, %v651
      %v682 = vadd.f32 %v577, %v664
      %v683 = vadd.f32 %v578, %v677
      %v684 = vld [vmem:[#allocation2] sm:$0xff]
      %v685 = vld [vmem:[#allocation2 + $0x8] sm:$0x3]
      %s686 = scalar_lea.vmem %s2, 16
      %v687 = vld [vmem:[%s686] sm:$0xf]
      %689 = vst [vmem:[#allocation1] ss:$4 sm:$0xff] %v684
      %s691 = scalar_lea.vmem [#allocation1], 32
      %692 = vst [vmem:[%s691] ss:$4 sm:$0xff] %v685
      %v693 = vld.sshfl [vmem:[#allocation1] sm:$0xff pattern:$0x73625140]
      %v695 = vld.sshfl [vmem:[#allocation1 + $0x8] sm:$0xff pattern:$0x73625140]
      %v697 = vld.sshfl [vmem:[#allocation1 + $0x10] sm:$0xff pattern:$0x73625140]
      %v699 = vld.sshfl [vmem:[#allocation1 + $0x18] sm:$0xff pattern:$0x73625140]
      %v701 = vld.sshfl [vmem:[#allocation1 + $0x20] sm:$0xff pattern:$0x73625140]
      %703 = vrot.lane.b32.xlu0 %v693, 109
      %v704 = vpop.permute.xlu0 %703
      %705 = vrot.lane.b32.xlu0 %v695, 109
      %v706 = vpop.permute.xlu0 %705
      %707 = vrot.lane.b32.xlu0 %v697, 109
      %v708 = vpop.permute.xlu0 %707
      %709 = vrot.lane.b32.xlu0 %v699, 109
      %v710 = vpop.permute.xlu0 %709
      %711 = vrot.lane.b32.xlu0 %v701, 109
      %v712 = vpop.permute.xlu0 %711
      %vm713 = vcmask 891904
      %v714 = vsel %vm713, %v704, %v706
      %v715 = vsel %vm713, %v706, %v708
      %v716 = vsel %vm713, %v708, %v710
      %v717 = vsel %vm713, %v710, %v712
      %v719 = vsel %vm336, %v687, 0
      %v722 = vsel %vm340, %v714, 0
      %v725 = vsel %vm340, %v715, 0
      %v728 = vsel %vm340, %v716, 0
      %v731 = vsel %vm340, %v717, 0
      %733 = vmatpush.bf16.msra.mxu0 0
      %734 = vmatpush.bf16.msra.mxu0 0
      %735 = vmatpush.bf16.msra.mxu0 0
      %736 = vmatpush.bf16.msra.mxu0 0
      %737 = vmatpush.bf16.msra.mxu0 0
      %738 = vmatpush.bf16.msra.mxu0 0
      %739 = vmatpush.bf16.msra.mxu0 0
      %740 = vmatpush.bf16.msra.mxu0 %v722
      %741 = vmatmul.bf16.gmra.mxu0 %v719
      %v742 = vpop.f32.mrf.mxu0
      %v743 = vadd.f32 0.0, %v742
      %v744 = vpop.f32.mrf.mxu0
      %745 = vdwg.mxu0
      %746 = vmatpush.bf16.msra.mxu0 0
      %747 = vmatpush.bf16.msra.mxu0 0
      %748 = vmatpush.bf16.msra.mxu0 0
      %749 = vmatpush.bf16.msra.mxu0 0
      %750 = vmatpush.bf16.msra.mxu0 0
      %751 = vmatpush.bf16.msra.mxu0 0
      %752 = vmatpush.bf16.msra.mxu0 0
      %753 = vmatpush.bf16.msra.mxu0 %v725
      %754 = vmatmul.bf16.gmra.mxu0 %v719
      %v755 = vpop.f32.mrf.mxu0
      %v756 = vadd.f32 0.0, %v755
      %v757 = vpop.f32.mrf.mxu0
      %758 = vdwg.mxu0
      %759 = vmatpush.bf16.msra.mxu0 0
      %760 = vmatpush.bf16.msra.mxu0 0
      %761 = vmatpush.bf16.msra.mxu0 0
      %762 = vmatpush.bf16.msra.mxu0 0
      %763 = vmatpush.bf16.msra.mxu0 0
      %764 = vmatpush.bf16.msra.mxu0 0
      %765 = vmatpush.bf16.msra.mxu0 0
      %766 = vmatpush.bf16.msra.mxu0 %v728
      %767 = vmatmul.bf16.gmra.mxu0 %v719
      %v768 = vpop.f32.mrf.mxu0
      %v769 = vadd.f32 0.0, %v768
      %v770 = vpop.f32.mrf.mxu0
      %771 = vdwg.mxu0
      %772 = vmatpush.bf16.msra.mxu0 0
      %773 = vmatpush.bf16.msra.mxu0 0
      %774 = vmatpush.bf16.msra.mxu0 0
      %775 = vmatpush.bf16.msra.mxu0 0
      %776 = vmatpush.bf16.msra.mxu0 0
      %777 = vmatpush.bf16.msra.mxu0 0
      %778 = vmatpush.bf16.msra.mxu0 0
      %779 = vmatpush.bf16.msra.mxu0 %v731
      %780 = vmatmul.bf16.gmra.mxu0 %v719
      %v781 = vpop.f32.mrf.mxu0
      %v782 = vadd.f32 0.0, %v781
      %v783 = vpop.f32.mrf.mxu0
      %784 = vdwg.mxu0
      %v785 = vadd.f32 %v680, %v743
      %v786 = vadd.f32 %v681, %v756
      %v787 = vadd.f32 %v682, %v769
      %v788 = vadd.f32 %v683, %v782
      %v789 = vld [vmem:[#allocation2] sm:$0xff]
      %v790 = vld [vmem:[#allocation2 + $0x8] sm:$0x3]
      %s791 = scalar_lea.vmem %s2, 20
      %v792 = vld [vmem:[%s791] sm:$0xf]
      %794 = vst [vmem:[#allocation1] ss:$4 sm:$0xff] %v789
      %s796 = scalar_lea.vmem [#allocation1], 32
      %797 = vst [vmem:[%s796] ss:$4 sm:$0xff] %v790
      %v798 = vld.sshfl [vmem:[#allocation1] sm:$0xff pattern:$0x73625140]
      %v800 = vld.sshfl [vmem:[#allocation1 + $0x8] sm:$0xff pattern:$0x73625140]
      %v802 = vld.sshfl [vmem:[#allocation1 + $0x10] sm:$0xff pattern:$0x73625140]
      %v804 = vld.sshfl [vmem:[#allocation1 + $0x18] sm:$0xff pattern:$0x73625140]
      %v806 = vld.sshfl [vmem:[#allocation1 + $0x20] sm:$0xff pattern:$0x73625140]
      %808 = vrot.lane.b32.xlu0 %v798, 108
      %v809 = vpop.permute.xlu0 %808
      %810 = vrot.lane.b32.xlu0 %v800, 108
      %v811 = vpop.permute.xlu0 %810
      %812 = vrot.lane.b32.xlu0 %v802, 108
      %v813 = vpop.permute.xlu0 %812
      %814 = vrot.lane.b32.xlu0 %v804, 108
      %v815 = vpop.permute.xlu0 %814
      %816 = vrot.lane.b32.xlu0 %v806, 108
      %v817 = vpop.permute.xlu0 %816
      %vm818 = vcmask 883712
      %v819 = vsel %vm818, %v809, %v811
      %v820 = vsel %vm818, %v811, %v813
      %v821 = vsel %vm818, %v813, %v815
      %v822 = vsel %vm818, %v815, %v817
      %v824 = vsel %vm336, %v792, 0
      %v827 = vsel %vm340, %v819, 0
      %v830 = vsel %vm340, %v820, 0
      %v833 = vsel %vm340, %v821, 0
      %v836 = vsel %vm340, %v822, 0
      %838 = vmatpush.bf16.msra.mxu0 0
      %839 = vmatpush.bf16.msra.mxu0 0
      %840 = vmatpush.bf16.msra.mxu0 0
      %841 = vmatpush.bf16.msra.mxu0 0
      %842 = vmatpush.bf16.msra.mxu0 0
      %843 = vmatpush.bf16.msra.mxu0 0
      %844 = vmatpush.bf16.msra.mxu0 0
      %845 = vmatpush.bf16.msra.mxu0 %v827
      %846 = vmatmul.bf16.gmra.mxu0 %v824
      %v847 = vpop.f32.mrf.mxu0
      %v848 = vadd.f32 0.0, %v847
      %v849 = vpop.f32.mrf.mxu0
      %850 = vdwg.mxu0
      %851 = vmatpush.bf16.msra.mxu0 0
      %852 = vmatpush.bf16.msra.mxu0 0
      %853 = vmatpush.bf16.msra.mxu0 0
      %854 = vmatpush.bf16.msra.mxu0 0
      %855 = vmatpush.bf16.msra.mxu0 0
      %856 = vmatpush.bf16.msra.mxu0 0
      %857 = vmatpush.bf16.msra.mxu0 0
      %858 = vmatpush.bf16.msra.mxu0 %v830
      %859 = vmatmul.bf16.gmra.mxu0 %v824
      %v860 = vpop.f32.mrf.mxu0
      %v861 = vadd.f32 0.0, %v860
      %v862 = vpop.f32.mrf.mxu0
      %863 = vdwg.mxu0
      %864 = vmatpush.bf16.msra.mxu0 0
      %865 = vmatpush.bf16.msra.mxu0 0
      %866 = vmatpush.bf16.msra.mxu0 0
      %867 = vmatpush.bf16.msra.mxu0 0
      %868 = vmatpush.bf16.msra.mxu0 0
      %869 = vmatpush.bf16.msra.mxu0 0
      %870 = vmatpush.bf16.msra.mxu0 0
      %871 = vmatpush.bf16.msra.mxu0 %v833
      %872 = vmatmul.bf16.gmra.mxu0 %v824
      %v873 = vpop.f32.mrf.mxu0
      %v874 = vadd.f32 0.0, %v873
      %v875 = vpop.f32.mrf.mxu0
      %876 = vdwg.mxu0
      %877 = vmatpush.bf16.msra.mxu0 0
      %878 = vmatpush.bf16.msra.mxu0 0
      %879 = vmatpush.bf16.msra.mxu0 0
      %880 = vmatpush.bf16.msra.mxu0 0
      %881 = vmatpush.bf16.msra.mxu0 0
      %882 = vmatpush.bf16.msra.mxu0 0
      %883 = vmatpush.bf16.msra.mxu0 0
      %884 = vmatpush.bf16.msra.mxu0 %v836
      %885 = vmatmul.bf16.gmra.mxu0 %v824
      %v886 = vpop.f32.mrf.mxu0
      %v887 = vadd.f32 0.0, %v886
      %v888 = vpop.f32.mrf.mxu0
      %889 = vdwg.mxu0
      %v890 = vadd.f32 %v785, %v848
      %v891 = vadd.f32 %v786, %v861
      %v892 = vadd.f32 %v787, %v874
      %v893 = vadd.f32 %v788, %v887
      %v894 = vld [vmem:[#allocation2] sm:$0xff]
      %v895 = vld [vmem:[#allocation2 + $0x8] sm:$0x3]
      %s896 = scalar_lea.vmem %s2, 24
      %v897 = vld [vmem:[%s896] sm:$0xf]
      %899 = vst [vmem:[#allocation1] ss:$4 sm:$0xff] %v894
      %s901 = scalar_lea.vmem [#allocation1], 32
      %902 = vst [vmem:[%s901] ss:$4 sm:$0xff] %v895
      %v903 = vld.sshfl [vmem:[#allocation1] sm:$0xff pattern:$0x73625140]
      %v905 = vld.sshfl [vmem:[#allocation1 + $0x8] sm:$0xff pattern:$0x73625140]
      %v907 = vld.sshfl [vmem:[#allocation1 + $0x10] sm:$0xff pattern:$0x73625140]
      %v909 = vld.sshfl [vmem:[#allocation1 + $0x18] sm:$0xff pattern:$0x73625140]
      %v911 = vld.sshfl [vmem:[#allocation1 + $0x20] sm:$0xff pattern:$0x73625140]
      %913 = vrot.lane.b32.xlu0 %v903, 92
      %v914 = vpop.permute.xlu0 %913
      %915 = vrot.lane.b32.xlu0 %v905, 92
      %v916 = vpop.permute.xlu0 %915
      %917 = vrot.lane.b32.xlu0 %v907, 92
      %v918 = vpop.permute.xlu0 %917
      %919 = vrot.lane.b32.xlu0 %v909, 92
      %v920 = vpop.permute.xlu0 %919
      %921 = vrot.lane.b32.xlu0 %v911, 92
      %v922 = vpop.permute.xlu0 %921
      %vm923 = vcmask 752640
      %v924 = vsel %vm923, %v914, %v916
      %v925 = vsel %vm923, %v916, %v918
      %v926 = vsel %vm923, %v918, %v920
      %v927 = vsel %vm923, %v920, %v922
      %v929 = vsel %vm336, %v897, 0
      %v932 = vsel %vm340, %v924, 0
      %v935 = vsel %vm340, %v925, 0
      %v938 = vsel %vm340, %v926, 0
      %v941 = vsel %vm340, %v927, 0
      %943 = vmatpush.bf16.msra.mxu0 0
      %944 = vmatpush.bf16.msra.mxu0 0
      %945 = vmatpush.bf16.msra.mxu0 0
      %946 = vmatpush.bf16.msra.mxu0 0
      %947 = vmatpush.bf16.msra.mxu0 0
      %948 = vmatpush.bf16.msra.mxu0 0
      %949 = vmatpush.bf16.msra.mxu0 0
      %950 = vmatpush.bf16.msra.mxu0 %v932
      %951 = vmatmul.bf16.gmra.mxu0 %v929
      %v952 = vpop.f32.mrf.mxu0
      %v953 = vadd.f32 0.0, %v952
      %v954 = vpop.f32.mrf.mxu0
      %955 = vdwg.mxu0
      %956 = vmatpush.bf16.msra.mxu0 0
      %957 = vmatpush.bf16.msra.mxu0 0
      %958 = vmatpush.bf16.msra.mxu0 0
      %959 = vmatpush.bf16.msra.mxu0 0
      %960 = vmatpush.bf16.msra.mxu0 0
      %961 = vmatpush.bf16.msra.mxu0 0
      %962 = vmatpush.bf16.msra.mxu0 0
      %963 = vmatpush.bf16.msra.mxu0 %v935
      %964 = vmatmul.bf16.gmra.mxu0 %v929
      %v965 = vpop.f32.mrf.mxu0
      %v966 = vadd.f32 0.0, %v965
      %v967 = vpop.f32.mrf.mxu0
      %968 = vdwg.mxu0
      %969 = vmatpush.bf16.msra.mxu0 0
      %970 = vmatpush.bf16.msra.mxu0 0
      %971 = vmatpush.bf16.msra.mxu0 0
      %972 = vmatpush.bf16.msra.mxu0 0
      %973 = vmatpush.bf16.msra.mxu0 0
      %974 = vmatpush.bf16.msra.mxu0 0
      %975 = vmatpush.bf16.msra.mxu0 0
      %976 = vmatpush.bf16.msra.mxu0 %v938
      %977 = vmatmul.bf16.gmra.mxu0 %v929
      %v978 = vpop.f32.mrf.mxu0
      %v979 = vadd.f32 0.0, %v978
      %v980 = vpop.f32.mrf.mxu0
      %981 = vdwg.mxu0
      %982 = vmatpush.bf16.msra.mxu0 0
      %983 = vmatpush.bf16.msra.mxu0 0
      %984 = vmatpush.bf16.msra.mxu0 0
      %985 = vmatpush.bf16.msra.mxu0 0
      %986 = vmatpush.bf16.msra.mxu0 0
      %987 = vmatpush.bf16.msra.mxu0 0
      %988 = vmatpush.bf16.msra.mxu0 0
      %989 = vmatpush.bf16.msra.mxu0 %v941
      %990 = vmatmul.bf16.gmra.mxu0 %v929
      %v991 = vpop.f32.mrf.mxu0
      %v992 = vadd.f32 0.0, %v991
      %v993 = vpop.f32.mrf.mxu0
      %994 = vdwg.mxu0
      %v995 = vadd.f32 %v890, %v953
      %v996 = vadd.f32 %v891, %v966
      %v997 = vadd.f32 %v892, %v979
      %v998 = vadd.f32 %v893, %v992
      %v999 = vld [vmem:[#allocation2] sm:$0xff]
      %v1000 = vld [vmem:[#allocation2 + $0x8] sm:$0x3]
      %s1001 = scalar_lea.vmem %s2, 28
      %v1002 = vld [vmem:[%s1001] sm:$0xf]
      %1004 = vst [vmem:[#allocation1] ss:$4 sm:$0xff] %v999
      %s1006 = scalar_lea.vmem [#allocation1], 32
      %1007 = vst [vmem:[%s1006] ss:$4 sm:$0xff] %v1000
      %v1008 = vld.sshfl [vmem:[#allocation1] sm:$0xff pattern:$0x73625140]
      %v1010 = vld.sshfl [vmem:[#allocation1 + $0x8] sm:$0xff pattern:$0x73625140]
      %v1012 = vld.sshfl [vmem:[#allocation1 + $0x10] sm:$0xff pattern:$0x73625140]
      %v1014 = vld.sshfl [vmem:[#allocation1 + $0x18] sm:$0xff pattern:$0x73625140]
      %v1016 = vld.sshfl [vmem:[#allocation1 + $0x20] sm:$0xff pattern:$0x73625140]
      %1018 = vrot.lane.b32.xlu0 %v1008, 91
      %v1019 = vpop.permute.xlu0 %1018
      %1020 = vrot.lane.b32.xlu0 %v1010, 91
      %v1021 = vpop.permute.xlu0 %1020
      %1022 = vrot.lane.b32.xlu0 %v1012, 91
      %v1023 = vpop.permute.xlu0 %1022
      %1024 = vrot.lane.b32.xlu0 %v1014, 91
      %v1025 = vpop.permute.xlu0 %1024
      %1026 = vrot.lane.b32.xlu0 %v1016, 91
      %v1027 = vpop.permute.xlu0 %1026
      %vm1028 = vcmask 744448
      %v1029 = vsel %vm1028, %v1019, %v1021
      %v1030 = vsel %vm1028, %v1021, %v1023
      %v1031 = vsel %vm1028, %v1023, %v1025
      %v1032 = vsel %vm1028, %v1025, %v1027
      %v1034 = vsel %vm336, %v1002, 0
      %v1037 = vsel %vm340, %v1029, 0
      %v1040 = vsel %vm340, %v1030, 0
      %v1043 = vsel %vm340, %v1031, 0
      %v1046 = vsel %vm340, %v1032, 0
      %1048 = vmatpush.bf16.msra.mxu0 0
      %1049 = vmatpush.bf16.msra.mxu0 0
      %1050 = vmatpush.bf16.msra.mxu0 0
      %1051 = vmatpush.bf16.msra.mxu0 0
      %1052 = vmatpush.bf16.msra.mxu0 0
      %1053 = vmatpush.bf16.msra.mxu0 0
      %1054 = vmatpush.bf16.msra.mxu0 0
      %1055 = vmatpush.bf16.msra.mxu0 %v1037
      %1056 = vmatmul.bf16.gmra.mxu0 %v1034
      %v1057 = vpop.f32.mrf.mxu0
      %v1058 = vadd.f32 0.0, %v1057
      %v1059 = vpop.f32.mrf.mxu0
      %1060 = vdwg.mxu0
      %1061 = vmatpush.bf16.msra.mxu0 0
      %1062 = vmatpush.bf16.msra.mxu0 0
      %1063 = vmatpush.bf16.msra.mxu0 0
      %1064 = vmatpush.bf16.msra.mxu0 0
      %1065 = vmatpush.bf16.msra.mxu0 0
      %1066 = vmatpush.bf16.msra.mxu0 0
      %1067 = vmatpush.bf16.msra.mxu0 0
      %1068 = vmatpush.bf16.msra.mxu0 %v1040
      %1069 = vmatmul.bf16.gmra.mxu0 %v1034
      %v1070 = vpop.f32.mrf.mxu0
      %v1071 = vadd.f32 0.0, %v1070
      %v1072 = vpop.f32.mrf.mxu0
      %1073 = vdwg.mxu0
      %1074 = vmatpush.bf16.msra.mxu0 0
      %1075 = vmatpush.bf16.msra.mxu0 0
      %1076 = vmatpush.bf16.msra.mxu0 0
      %1077 = vmatpush.bf16.msra.mxu0 0
      %1078 = vmatpush.bf16.msra.mxu0 0
      %1079 = vmatpush.bf16.msra.mxu0 0
      %1080 = vmatpush.bf16.msra.mxu0 0
      %1081 = vmatpush.bf16.msra.mxu0 %v1043
      %1082 = vmatmul.bf16.gmra.mxu0 %v1034
      %v1083 = vpop.f32.mrf.mxu0
      %v1084 = vadd.f32 0.0, %v1083
      %v1085 = vpop.f32.mrf.mxu0
      %1086 = vdwg.mxu0
      %1087 = vmatpush.bf16.msra.mxu0 0
      %1088 = vmatpush.bf16.msra.mxu0 0
      %1089 = vmatpush.bf16.msra.mxu0 0
      %1090 = vmatpush.bf16.msra.mxu0 0
      %1091 = vmatpush.bf16.msra.mxu0 0
      %1092 = vmatpush.bf16.msra.mxu0 0
      %1093 = vmatpush.bf16.msra.mxu0 0
      %1094 = vmatpush.bf16.msra.mxu0 %v1046
      %1095 = vmatmul.bf16.gmra.mxu0 %v1034
      %v1096 = vpop.f32.mrf.mxu0
      %v1097 = vadd.f32 0.0, %v1096
      %v1098 = vpop.f32.mrf.mxu0
      %1099 = vdwg.mxu0
      %v1100 = vadd.f32 %v995, %v1058
      %v1101 = vadd.f32 %v996, %v1071
      %v1102 = vadd.f32 %v997, %v1084
      %v1103 = vadd.f32 %v998, %v1097
      %v1104 = vld [vmem:[#allocation2] sm:$0xff]
      %v1105 = vld [vmem:[#allocation2 + $0x8] sm:$0x3]
      %s1106 = scalar_lea.vmem %s2, 32
      %v1107 = vld [vmem:[%s1106] sm:$0xf]
      %1109 = vst [vmem:[#allocation1] ss:$4 sm:$0xff] %v1104
      %s1111 = scalar_lea.vmem [#allocation1], 32
      %1112 = vst [vmem:[%s1111] ss:$4 sm:$0xff] %v1105
      %v1113 = vld.sshfl [vmem:[#allocation1] sm:$0xff pattern:$0x73625140]
      %v1115 = vld.sshfl [vmem:[#allocation1 + $0x8] sm:$0xff pattern:$0x73625140]
      %v1117 = vld.sshfl [vmem:[#allocation1 + $0x10] sm:$0xff pattern:$0x73625140]
      %v1119 = vld.sshfl [vmem:[#allocation1 + $0x18] sm:$0xff pattern:$0x73625140]
      %v1121 = vld.sshfl [vmem:[#allocation1 + $0x20] sm:$0xff pattern:$0x73625140]
      %1123 = vrot.lane.b32.xlu0 %v1113, 90
      %v1124 = vpop.permute.xlu0 %1123
      %1125 = vrot.lane.b32.xlu0 %v1115, 90
      %v1126 = vpop.permute.xlu0 %1125
      %1127 = vrot.lane.b32.xlu0 %v1117, 90
      %v1128 = vpop.permute.xlu0 %1127
      %1129 = vrot.lane.b32.xlu0 %v1119, 90
      %v1130 = vpop.permute.xlu0 %1129
      %1131 = vrot.lane.b32.xlu0 %v1121, 90
      %v1132 = vpop.permute.xlu0 %1131
      %vm1133 = vcmask 736256
      %v1134 = vsel %vm1133, %v1124, %v1126
      %v1135 = vsel %vm1133, %v1126, %v1128
      %v1136 = vsel %vm1133, %v1128, %v1130
      %v1137 = vsel %vm1133, %v1130, %v1132
      %v1139 = vsel %vm336, %v1107, 0
      %v1142 = vsel %vm340, %v1134, 0
      %v1145 = vsel %vm340, %v1135, 0
      %v1148 = vsel %vm340, %v1136, 0
      %v1151 = vsel %vm340, %v1137, 0
      %1153 = vmatpush.bf16.msra.mxu0 0
      %1154 = vmatpush.bf16.msra.mxu0 0
      %1155 = vmatpush.bf16.msra.mxu0 0
      %1156 = vmatpush.bf16.msra.mxu0 0
      %1157 = vmatpush.bf16.msra.mxu0 0
      %1158 = vmatpush.bf16.msra.mxu0 0
      %1159 = vmatpush.bf16.msra.mxu0 0
      %1160 = vmatpush.bf16.msra.mxu0 %v1142
      %1161 = vmatmul.bf16.gmra.mxu0 %v1139
      %v1162 = vpop.f32.mrf.mxu0
      %v1163 = vadd.f32 0.0, %v1162
      %v1164 = vpop.f32.mrf.mxu0
      %1165 = vdwg.mxu0
      %1166 = vmatpush.bf16.msra.mxu0 0
      %1167 = vmatpush.bf16.msra.mxu0 0
      %1168 = vmatpush.bf16.msra.mxu0 0
      %1169 = vmatpush.bf16.msra.mxu0 0
      %1170 = vmatpush.bf16.msra.mxu0 0
      %1171 = vmatpush.bf16.msra.mxu0 0
      %1172 = vmatpush.bf16.msra.mxu0 0
      %1173 = vmatpush.bf16.msra.mxu0 %v1145
      %1174 = vmatmul.bf16.gmra.mxu0 %v1139
      %v1175 = vpop.f32.mrf.mxu0
      %v1176 = vadd.f32 0.0, %v1175
      %v1177 = vpop.f32.mrf.mxu0
      %1178 = vdwg.mxu0
      %1179 = vmatpush.bf16.msra.mxu0 0
      %1180 = vmatpush.bf16.msra.mxu0 0
      %1181 = vmatpush.bf16.msra.mxu0 0
      %1182 = vmatpush.bf16.msra.mxu0 0
      %1183 = vmatpush.bf16.msra.mxu0 0
      %1184 = vmatpush.bf16.msra.mxu0 0
      %1185 = vmatpush.bf16.msra.mxu0 0
      %1186 = vmatpush.bf16.msra.mxu0 %v1148
      %1187 = vmatmul.bf16.gmra.mxu0 %v1139
      %v1188 = vpop.f32.mrf.mxu0
      %v1189 = vadd.f32 0.0, %v1188
      %v1190 = vpop.f32.mrf.mxu0
      %1191 = vdwg.mxu0
      %1192 = vmatpush.bf16.msra.mxu0 0
      %1193 = vmatpush.bf16.msra.mxu0 0
      %1194 = vmatpush.bf16.msra.mxu0 0
      %1195 = vmatpush.bf16.msra.mxu0 0
      %1196 = vmatpush.bf16.msra.mxu0 0
      %1197 = vmatpush.bf16.msra.mxu0 0
      %1198 = vmatpush.bf16.msra.mxu0 0
      %1199 = vmatpush.bf16.msra.mxu0 %v1151
      %1200 = vmatmul.bf16.gmra.mxu0 %v1139
      %v1201 = vpop.f32.mrf.mxu0
      %v1202 = vadd.f32 0.0, %v1201
      %v1203 = vpop.f32.mrf.mxu0
      %1204 = vdwg.mxu0
      %v1205 = vadd.f32 %v1100, %v1163
      %v1206 = vadd.f32 %v1101, %v1176
      %v1207 = vadd.f32 %v1102, %v1189
      %v1208 = vadd.f32 %v1103, %v1202
      %v1209 = vpack.c.bf16 %v1206, %v1205
      %v1210 = vpack.c.bf16 %v1208, %v1207
      %1211 = vst [vmem:[%s289] sm:$0xff] %v1209
      %1212 = vst [vmem:[%s289 + $0x8] sm:$0xff] %v1210
      %v1213 = vld [vmem:[%s283] sm:$0xf]
      %v1214 = vunpack.c.l.bf16 %v1213
      %v1216 = vperm.slane %v1214, 0
      %v1217 = vperm.slane %v1214, 2
      %v1218 = vperm.slane %v1214, 4
      %v1219 = vperm.slane %v1214, 6
      %v1224 = vperm.slane %v1216, 0
      %v1225 = vperm.slane %v1217, 0
      %v1226 = vperm.slane %v1218, 0
      %v1227 = vperm.slane %v1219, 0
      %v1228 = vmul.f32 %v1205, %v1224
      %v1229 = vmul.f32 %v1206, %v1225
      %v1230 = vmul.f32 %v1207, %v1226
      %v1231 = vmul.f32 %v1208, %v1227
      %v1232 = vadd.f32 %v1228, %v1229
      %v1233 = vadd.f32 %v1232, %v1230
      %v1234 = vadd.f32 %v1233, %v1231
      %1235 = vadd.xlane.f32.xlu0 %v1234
      %v1236 = vpop.xlane.xlu0 %1235
      %v1237 = vadd.f32 %v1236, 0.0
      %v1238 = vmul.f32 %v1205, %v1228
      %v1239 = vmul.f32 %v1206, %v1229
      %v1240 = vmul.f32 %v1207, %v1230
      %v1241 = vmul.f32 %v1208, %v1231
      %v1242 = vadd.f32 %v1238, %v1239
      %v1243 = vadd.f32 %v1242, %v1240
      %v1244 = vadd.f32 %v1243, %v1241
      %1245 = vadd.xlane.f32.xlu0 %v1244
      %v1246 = vpop.xlane.xlu0 %1245
      %v1247 = vadd.f32 %v1246, 0.0
      %vm1248 = vcmask 7168
      %v1249 = vsel %vm1248, %v1237, %v1247
      %vm1250 = vcmask 15360
      %1251 = vst.msk [vmem:[%s294] sm:$0xff] %vm1250, %v1249
      %s1252 = smul.u32 4, %s17
      %p1253 = scmp.lt.s32.totalorder %s1252, 7
      %s1254 = scalar_select %p1253, %s1252, 7
      %s1255 = smul.addr %s1254, 4
      %s1256 = scalar_lea.vmem %s4, %s1255
      %p1257 = scmp.lt.s32.totalorder %s17, 1
      %s1258 = scalar_select %p1257, %s17, 1
      %s1259 = smul.addr %s1258, 8
      %s1260 = scalar_lea.vmem %s5, %s1259
      // Predicated region
      $region37: #{noise_encoder_forward.2} parent=35 // pred_check
        %p1261 = pneg %p134
      $region38: #{noise_encoder_forward.2} parent=35 // pred_check_branch
        %1263 = sbr.rel (%p1261) target = $region40
      $region39: #{noise_encoder_forward.2} parent=35 // pred_region
        %s1264 = smul.u32 4, %s17
      $region40: #{noise_encoder_forward.2} parent=35 // pred_fallthru
        _
      // Predicated region
      $region41: #{noise_encoder_forward.2} parent=35 // pred_check
        %p1265 = pneg %p160
      $region42: #{noise_encoder_forward.2} parent=35 // pred_check_branch
        %1267 = sbr.rel (%p1265) target = $region44
      $region43: #{noise_encoder_forward.2} parent=35 // pred_region
        _
      $region44: #{noise_encoder_forward.2} parent=35 // pred_fallthru
        _
    $region36: #{noise_encoder_forward.2} parent=5 // pred_fallthru
      _
    %p1268 = scmp.le.s32.totalorder 2, %s12
    // Predicated region
    $region45: #{noise_encoder_forward.2} parent=5 // pred_check
      %p1269 = pneg %p1268
    $region46: #{noise_encoder_forward.2} parent=5 // pred_check_branch
      %1271 = sbr.rel (%p1269) target = $region48
    $region47: #{noise_encoder_forward.2} parent=5 // pred_region
      %s1272 = ssub.s32 %s12, 2
      // Predicated region
      $region49: #{noise_encoder_forward.2} parent=47 // pred_check
        %p1273 = pneg %p140
      $region50: #{noise_encoder_forward.2} parent=47 // pred_check_branch
        %1275 = sbr.rel (%p1273) target = $region52
      $region51: #{noise_encoder_forward.2} parent=47 // pred_region
        %s1276 = smul.u32 4, %s18
        %p1277 = scmp.lt.s32.totalorder %s1276, 7
        %s1278 = scalar_select %p1277, %s1276, 7
        %s1279 = smul.addr %s1278, 4
        %s1280 = scalar_lea.vmem %s4, %s1279
      $region52: #{noise_encoder_forward.2} parent=47 // pred_fallthru
        _
      // Predicated region
      $region53: #{noise_encoder_forward.2} parent=47 // pred_check
        %p1281 = pneg %p166
      $region54: #{noise_encoder_forward.2} parent=47 // pred_check_branch
        %1283 = sbr.rel (%p1281) target = $region56
      $region55: #{noise_encoder_forward.2} parent=47 // pred_region
        %p1284 = scmp.lt.s32.totalorder %s18, 1
        %s1285 = scalar_select %p1284, %s18, 1
        %s1286 = smul.addr %s1285, 8
        %s1287 = scalar_lea.vmem %s5, %s1286
      $region56: #{noise_encoder_forward.2} parent=47 // pred_fallthru
        _
    $region48: #{noise_encoder_forward.2} parent=5 // pred_fallthru
      _
  $region6: #{noise_encoder_forward.2} parent=0 // loop_footer
    %s16 = sadd.s32 1, %s12
  $region7: #{noise_encoder_forward.2} parent=0 // loop_footer_branch
    %11 = sbr.rel target = $region3
  $region8: #{noise_encoder_forward.2} parent=0 // loop_exit
    _

</llo_original>
